<compile_context>
chip_gen: v7x
topology: tpu7x:2x2x1
jax: 0.10.0
libtpu: 0.0.40
codegen_flags: <defaults>
</compile_context>

<pallas_src>
import numpy as np
import jax
import jax.numpy as jnp
from jax.experimental import pallas as pl
from jax.experimental.pallas import tpu as pltpu

EPS = 1e-5


def _interp_matrix(n_in: int, n_out: int) -> np.ndarray:
    """align_corners=True bilinear interpolation matrix (n_out, n_in)."""
    if n_in == 1:
        return np.ones((n_out, 1), np.float32)
    scale = (n_in - 1) / (n_out - 1)
    src = np.arange(n_out, dtype=np.float64) * scale
    i0 = np.clip(np.floor(src).astype(np.int64), 0, n_in - 2)
    frac = src - i0
    m = np.zeros((n_out, n_in), np.float64)
    m[np.arange(n_out), i0] += 1.0 - frac
    m[np.arange(n_out), i0 + 1] += frac
    return m.astype(np.float32)


def up_forward(x1, x2, U, w1, g1, b1, w2, g2, b2):
    """x1, x2: NHWC float32.  U: (4*H1*W1, H1*W1) align_corners interp operator.
       w1: (3,3,Cin,Cmid) HWIO, w2: (3,3,Cmid,Cout) HWIO (bias-free convs).
       g*/b*: per-channel BatchNorm affine params."""
    N, H1, W1, C1 = x1.shape
    _, H2, W2, C2 = x2.shape
    Cin = C1 + C2
    Cmid = w1.shape[-1]
    Cout = w2.shape[-1]
    Hu, Wu = 2 * H1, 2 * W1
    HW1, HW2 = H1 * W1, H2 * W2
    NP = N * HW2                       # flattened (n, y, x) lane axis
    Gp = W2 + 1                        # lane guard >= max |3x3 tap shift|
    Cg = ((max(Cin, Cmid) + 7) // 8) * 8   # sublane-tile aligned channel slab

    # ---------- wrapper-side layout plumbing / constant operators ----------
    x1s = jnp.transpose(x1, (3, 0, 1, 2)).reshape(C1, N * HW1)
    x2s = jnp.transpose(x2, (3, 0, 1, 2)).reshape(C2, NP)

    # upsample + F.pad folded into one (HW2, HW1) operator, block-diag over N.
    dy, dx = H2 - Hu, W2 - Wu
    rows = np.asarray([(yu + dy // 2) * W2 + (xu + dx // 2)
                       for yu in range(Hu) for xu in range(Wu)], np.int32)
    u_pad = jnp.zeros((HW2, HW1), jnp.float32).at[rows].set(U)
    u_bd = jnp.kron(jnp.eye(N, dtype=jnp.float32), u_pad.T)     # (N*HW1, NP)

    # per-tap validity masks for SAME 3x3 conv, tiled over the batch.
    yy, xx = np.meshgrid(np.arange(H2), np.arange(W2), indexing="ij")
    tap_masks = np.zeros((9, NP), np.float32)
    for ky in range(3):
        for kx in range(3):
            valid = ((yy + ky - 1 >= 0) & (yy + ky - 1 < H2) &
                     (xx + kx - 1 >= 0) & (xx + kx - 1 < W2))
            tap_masks[ky * 3 + kx] = np.tile(valid.reshape(-1).astype(np.float32), N)
    tap_masks = jnp.asarray(tap_masks)

    # conv weights -> (Co, 9*Cg) bf16 MXU operands (zero-padded dummy channels).
    w1p = jnp.zeros((3, 3, Cg, Cmid), jnp.float32).at[:, :, :Cin, :].set(w1)
    w2p = jnp.zeros((3, 3, Cg, Cout), jnp.float32).at[:, :, :Cmid, :].set(w2)
    w1m = jnp.transpose(w1p, (3, 0, 1, 2)).reshape(Cmid, 9 * Cg).astype(jnp.bfloat16)
    w2m = jnp.transpose(w2p, (3, 0, 1, 2)).reshape(Cout, 9 * Cg).astype(jnp.bfloat16)
    g1c, b1c = g1.reshape(Cmid, 1), b1.reshape(Cmid, 1)
    g2c, b2c = g2.reshape(Cout, 1), b2.reshape(Cout, 1)

    inv_count = 1.0 / float(NP)

    def kernel(x1s_ref, x2s_ref, u_ref, w1_ref, g1_ref, b1_ref,
               w2_ref, g2_ref, b2_ref, mask_ref, o_ref, xg_ref):
        masks = mask_ref[...]                                   # (9, NP) f32

        # zero only the two lane guard strips of the shared input slab.
        xg_ref[:, 0:Gp] = jnp.zeros((Cg, Gp), jnp.float32)
        xg_ref[:, Gp + NP:Gp + NP + Gp] = jnp.zeros((Cg, Gp), jnp.float32)

        def conv3x3(wmat):
            # im2col from 9 lane-shifted, masked views -> single MXU matmul.
            slabs = []
            for ky in range(3):
                for kx in range(3):
                    s0 = (ky - 1) * W2 + (kx - 1)
                    t = ky * 3 + kx
                    sl = xg_ref[:, Gp + s0:Gp + s0 + NP]        # (Cg, NP)
                    slabs.append(sl * masks[t:t + 1, :])
            patches = jnp.concatenate(slabs, axis=0).astype(jnp.bfloat16)
            return jnp.dot(wmat, patches,
                           preferred_element_type=jnp.float32)  # (Co, NP) f32

        def bn_relu(y, g, b):
            m = jnp.sum(y, axis=1, keepdims=True) * inv_count
            d = y - m
            v = jnp.sum(d * d, axis=1, keepdims=True) * inv_count
            return jnp.maximum(d * jax.lax.rsqrt(v + EPS) * g + b, 0.0)

        # ---- upsample (+ pad) of x1 for the whole batch: one f32 matmul;
        #      skip-connection concat is just two lane-dense slab stores.
        up = jnp.dot(x1s_ref[...], u_ref[...],
                     preferred_element_type=jnp.float32)         # (C1, NP)
        xg_ref[0:C2, Gp:Gp + NP] = x2s_ref[...]
        xg_ref[C2:Cin, Gp:Gp + NP] = up
        if Cin < Cg:
            xg_ref[Cin:Cg, Gp:Gp + NP] = jnp.zeros((Cg - Cin, NP), jnp.float32)

        # ---- conv1 -> BN -> ReLU (values stay in registers)
        h1 = bn_relu(conv3x3(w1_ref[...]), g1_ref[...], b1_ref[...])  # (Cmid,NP)

        # ---- reuse the guarded slab for conv2's input
        xg_ref[0:Cmid, Gp:Gp + NP] = h1
        if Cmid < Cg:
            xg_ref[Cmid:Cg, Gp:Gp + NP] = jnp.zeros((Cg - Cmid, NP), jnp.float32)

        # ---- conv2 -> BN -> ReLU -> lane-dense output slab
        o_ref[...] = bn_relu(conv3x3(w2_ref[...]), g2_ref[...], b2_ref[...])

    vmem = pl.BlockSpec(memory_space=pltpu.MemorySpace.VMEM)
    out = pl.pallas_call(
        kernel,
        out_shape=jax.ShapeDtypeStruct((Cout, NP), jnp.float32),
        in_specs=[vmem] * 10,
        out_specs=vmem,
        scratch_shapes=[pltpu.VMEM((Cg, NP + 2 * Gp), jnp.float32)],
        compiler_params=pltpu.CompilerParams(
            vmem_limit_bytes=32 * 1024 * 1024),
    )(x1s, x2s, u_bd, w1m, g1c, b1c, w2m, g2c, b2c, tap_masks)

    # back to NHWC
    return jnp.transpose(out.reshape(Cout, N, H2, W2), (1, 2, 3, 0))


def ref_forward(x1, x2, U, w1, g1, b1, w2, g2, b2):
    """Pure-JAX reference (same math as the PyTorch Up module, NHWC)."""
    N, H1, W1, C1 = x1.shape
    _, H2, W2, _ = x2.shape
    up = jnp.einsum('pq,nqc->npc', U, x1.reshape(N, H1 * W1, C1))
    up = up.reshape(N, 2 * H1, 2 * W1, C1)
    dy, dx = H2 - 2 * H1, W2 - 2 * W1
    up = jnp.pad(up, ((0, 0), (dy // 2, dy - dy // 2),
                      (dx // 2, dx - dx // 2), (0, 0)))
    x = jnp.concatenate([x2, up], axis=-1)

    def conv_bn_relu(x, w, g, b):
        y = jax.lax.conv_general_dilated(
            x, w, (1, 1), 'SAME',
            dimension_numbers=('NHWC', 'HWIO', 'NHWC'))
        m = jnp.mean(y, axis=(0, 1, 2), keepdims=True)
        v = jnp.var(y, axis=(0, 1, 2), keepdims=True)
        y = (y - m) / jnp.sqrt(v + EPS) * g.reshape(1, 1, 1, -1) + b.reshape(1, 1, 1, -1)
        return jnp.maximum(y, 0.0)

    x = conv_bn_relu(x, w1, g1, b1)
    x = conv_bn_relu(x, w2, g2, b2)
    return x


if __name__ == "__main__":
    # Up(in_channels=8, out_channels=4, bilinear=True):
    #   x1: 4 channels at 8x8, x2: 4 channels at 16x16, mid = in_channels//2 = 4
    N, C1, C2 = 2, 4, 4
    H1 = W1 = 8
    H2 = W2 = 16
    Cin, Cmid, Cout = C1 + C2, (C1 + C2) // 2, 4

    key = jax.random.PRNGKey(0)
    ks = jax.random.split(key, 8)
    x1 = jax.random.normal(ks[0], (N, H1, W1, C1), jnp.float32)
    x2 = jax.random.normal(ks[1], (N, H2, W2, C2), jnp.float32)

    # conv weights (rounded to bf16-representable values so kernel and f32
    # reference share identical parameters), BN affine params.
    w1 = (0.1 * jax.random.normal(ks[2], (3, 3, Cin, Cmid), jnp.float32)
          ).astype(jnp.bfloat16).astype(jnp.float32)
    w2 = (0.1 * jax.random.normal(ks[3], (3, 3, Cmid, Cout), jnp.float32)
          ).astype(jnp.bfloat16).astype(jnp.float32)
    g1 = 1.0 + 0.1 * jax.random.normal(ks[4], (Cmid,), jnp.float32)
    b1 = 0.1 * jax.random.normal(ks[5], (Cmid,), jnp.float32)
    g2 = 1.0 + 0.1 * jax.random.normal(ks[6], (Cout,), jnp.float32)
    b2 = 0.1 * jax.random.normal(ks[7], (Cout,), jnp.float32)

    # bilinear (align_corners=True) upsample operator on flattened spatial dims
    Uh = _interp_matrix(H1, 2 * H1)
    Uw = _interp_matrix(W1, 2 * W1)
    U = jnp.asarray(np.kron(Uh, Uw))        # (4*H1*W1, H1*W1)

    out = up_forward(x1, x2, U, w1, g1, b1, w2, g2, b2)
    jax.block_until_ready(out)

    ref = ref_forward(x1, x2, U, w1, g1, b1, w2, g2, b2)
    # tolerance sized for bf16 conv-matmul operands with f32 accumulation
    np.testing.assert_allclose(np.asarray(out), np.asarray(ref),
                               rtol=1e-2, atol=1e-2)
    print("KERNEL_OK")
</pallas_src>

<mosaic_0001>
module attributes {stable_mosaic.version = 11 : i64} {
  func.func @kernel(%arg0: memref<4x128xf32, #tpu.memory_space<vmem>>, %arg1: memref<4x512xf32, #tpu.memory_space<vmem>>, %arg2: memref<128x512xf32, #tpu.memory_space<vmem>>, %arg3: memref<4x72xbf16, #tpu.memory_space<vmem>>, %arg4: memref<4x1xf32, #tpu.memory_space<vmem>>, %arg5: memref<4x1xf32, #tpu.memory_space<vmem>>, %arg6: memref<4x72xbf16, #tpu.memory_space<vmem>>, %arg7: memref<4x1xf32, #tpu.memory_space<vmem>>, %arg8: memref<4x1xf32, #tpu.memory_space<vmem>>, %arg9: memref<9x512xf32, #tpu.memory_space<vmem>>, %arg10: memref<4x512xf32, #tpu.memory_space<vmem>>, %arg11: memref<8x546xf32, #tpu.memory_space<vmem>>) attributes {dimension_semantics = [], scalar_prefetch = 0 : i64, scratch_operands = 1 : i64, tpu.core_type = #tpu.core_type<tc>} {
    %c0 = arith.constant 0 : index
    %c0_0 = arith.constant 0 : index
    %0 = vector.load %arg9[%c0, %c0_0] : memref<9x512xf32, #tpu.memory_space<vmem>>, vector<9x512xf32>
    %cst = arith.constant 0.000000e+00 : f32
    %1 = vector.broadcast %cst : f32 to vector<8x17xf32>
    %c0_1 = arith.constant 0 : index
    %c0_2 = arith.constant 0 : index
    %2 = vector.load %arg11[%c0_1, %c0_2] : memref<8x546xf32, #tpu.memory_space<vmem>>, vector<8x17xf32>
    tpu.vector_store %arg11[%c0_1, %c0_2], %1 {strides = array<i32>} : memref<8x546xf32, #tpu.memory_space<vmem>>, vector<8x17xf32>,
    %cst_3 = arith.constant 0.000000e+00 : f32
    %3 = vector.broadcast %cst_3 : f32 to vector<8x17xf32>
    %c0_4 = arith.constant 0 : index
    %c529 = arith.constant 529 : index
    %4 = vector.load %arg11[%c0_4, %c529] : memref<8x546xf32, #tpu.memory_space<vmem>>, vector<8x17xf32>
    tpu.vector_store %arg11[%c0_4, %c529], %3 {strides = array<i32>} : memref<8x546xf32, #tpu.memory_space<vmem>>, vector<8x17xf32>,
    %c0_5 = arith.constant 0 : index
    %c0_6 = arith.constant 0 : index
    %5 = vector.load %arg0[%c0_5, %c0_6] : memref<4x128xf32, #tpu.memory_space<vmem>>, vector<4x128xf32>
    %c0_7 = arith.constant 0 : index
    %c0_8 = arith.constant 0 : index
    %6 = vector.load %arg2[%c0_7, %c0_8] : memref<128x512xf32, #tpu.memory_space<vmem>>, vector<128x512xf32>
    %cst_9 = arith.constant dense<0.000000e+00> : vector<4x512xf32>
    %7 = tpu.matmul %5, %6, %cst_9 {dimension_numbers = #tpu.dot_dimension_numbers<[1], [0], [0], [1], [0, 0, 1, 1], [], []>} : vector<4x128xf32>, vector<128x512xf32>, vector<4x512xf32> -> vector<4x512xf32>
    %c0_10 = arith.constant 0 : index
    %c0_11 = arith.constant 0 : index
    %8 = vector.load %arg1[%c0_10, %c0_11] : memref<4x512xf32, #tpu.memory_space<vmem>>, vector<4x512xf32>
    %c0_12 = arith.constant 0 : index
    %c17 = arith.constant 17 : index
    %9 = vector.load %arg11[%c0_12, %c17] : memref<8x546xf32, #tpu.memory_space<vmem>>, vector<4x512xf32>
    tpu.vector_store %arg11[%c0_12, %c17], %8 {strides = array<i32>} : memref<8x546xf32, #tpu.memory_space<vmem>>, vector<4x512xf32>,
    %c4 = arith.constant 4 : index
    %c17_13 = arith.constant 17 : index
    %10 = vector.load %arg11[%c4, %c17_13] : memref<8x546xf32, #tpu.memory_space<vmem>>, vector<4x512xf32>
    tpu.vector_store %arg11[%c4, %c17_13], %7 {strides = array<i32>} : memref<8x546xf32, #tpu.memory_space<vmem>>, vector<4x512xf32>,
    %c0_14 = arith.constant 0 : index
    %c0_15 = arith.constant 0 : index
    %11 = vector.load %arg3[%c0_14, %c0_15] : memref<4x72xbf16, #tpu.memory_space<vmem>>, vector<4x72xbf16>
    %c0_16 = arith.constant 0 : index
    %c0_17 = arith.constant 0 : index
    %12 = vector.load %arg11[%c0_16, %c0_17] : memref<8x546xf32, #tpu.memory_space<vmem>>, vector<8x512xf32>
    %13 = vector.extract_strided_slice %0 {offsets = [0, 0], sizes = [1, 512], strides = [1, 1]} : vector<9x512xf32> to vector<1x512xf32>
    %14 = vector.broadcast %13 : vector<1x512xf32> to vector<8x512xf32>
    %15 = arith.mulf %12, %14 : vector<8x512xf32>
    %c0_18 = arith.constant 0 : index
    %c1 = arith.constant 1 : index
    %16 = vector.load %arg11[%c0_18, %c1] : memref<8x546xf32, #tpu.memory_space<vmem>>, vector<8x512xf32>
    %17 = vector.extract_strided_slice %0 {offsets = [1, 0], sizes = [1, 512], strides = [1, 1]} : vector<9x512xf32> to vector<1x512xf32>
    %18 = vector.broadcast %17 : vector<1x512xf32> to vector<8x512xf32>
    %19 = arith.mulf %16, %18 : vector<8x512xf32>
    %c0_19 = arith.constant 0 : index
    %c2 = arith.constant 2 : index
    %20 = vector.load %arg11[%c0_19, %c2] : memref<8x546xf32, #tpu.memory_space<vmem>>, vector<8x512xf32>
    %21 = vector.extract_strided_slice %0 {offsets = [2, 0], sizes = [1, 512], strides = [1, 1]} : vector<9x512xf32> to vector<1x512xf32>
    %22 = vector.broadcast %21 : vector<1x512xf32> to vector<8x512xf32>
    %23 = arith.mulf %20, %22 : vector<8x512xf32>
    %c0_20 = arith.constant 0 : index
    %c16 = arith.constant 16 : index
    %24 = vector.load %arg11[%c0_20, %c16] : memref<8x546xf32, #tpu.memory_space<vmem>>, vector<8x512xf32>
    %25 = vector.extract_strided_slice %0 {offsets = [3, 0], sizes = [1, 512], strides = [1, 1]} : vector<9x512xf32> to vector<1x512xf32>
    %26 = vector.broadcast %25 : vector<1x512xf32> to vector<8x512xf32>
    %27 = arith.mulf %24, %26 : vector<8x512xf32>
    %c0_21 = arith.constant 0 : index
    %c17_22 = arith.constant 17 : index
    %28 = vector.load %arg11[%c0_21, %c17_22] : memref<8x546xf32, #tpu.memory_space<vmem>>, vector<8x512xf32>
    %29 = vector.extract_strided_slice %0 {offsets = [4, 0], sizes = [1, 512], strides = [1, 1]} : vector<9x512xf32> to vector<1x512xf32>
    %30 = vector.broadcast %29 : vector<1x512xf32> to vector<8x512xf32>
    %31 = arith.mulf %28, %30 : vector<8x512xf32>
    %c0_23 = arith.constant 0 : index
    %c18 = arith.constant 18 : index
    %32 = vector.load %arg11[%c0_23, %c18] : memref<8x546xf32, #tpu.memory_space<vmem>>, vector<8x512xf32>
    %33 = vector.extract_strided_slice %0 {offsets = [5, 0], sizes = [1, 512], strides = [1, 1]} : vector<9x512xf32> to vector<1x512xf32>
    %34 = vector.broadcast %33 : vector<1x512xf32> to vector<8x512xf32>
    %35 = arith.mulf %32, %34 : vector<8x512xf32>
    %c0_24 = arith.constant 0 : index
    %c32 = arith.constant 32 : index
    %36 = vector.load %arg11[%c0_24, %c32] : memref<8x546xf32, #tpu.memory_space<vmem>>, vector<8x512xf32>
    %37 = vector.extract_strided_slice %0 {offsets = [6, 0], sizes = [1, 512], strides = [1, 1]} : vector<9x512xf32> to vector<1x512xf32>
    %38 = vector.broadcast %37 : vector<1x512xf32> to vector<8x512xf32>
    %39 = arith.mulf %36, %38 : vector<8x512xf32>
    %c0_25 = arith.constant 0 : index
    %c33 = arith.constant 33 : index
    %40 = vector.load %arg11[%c0_25, %c33] : memref<8x546xf32, #tpu.memory_space<vmem>>, vector<8x512xf32>
    %41 = vector.extract_strided_slice %0 {offsets = [7, 0], sizes = [1, 512], strides = [1, 1]} : vector<9x512xf32> to vector<1x512xf32>
    %42 = vector.broadcast %41 : vector<1x512xf32> to vector<8x512xf32>
    %43 = arith.mulf %40, %42 : vector<8x512xf32>
    %c0_26 = arith.constant 0 : index
    %c34 = arith.constant 34 : index
    %44 = vector.load %arg11[%c0_26, %c34] : memref<8x546xf32, #tpu.memory_space<vmem>>, vector<8x512xf32>
    %45 = vector.extract_strided_slice %0 {offsets = [8, 0], sizes = [1, 512], strides = [1, 1]} : vector<9x512xf32> to vector<1x512xf32>
    %46 = vector.broadcast %45 : vector<1x512xf32> to vector<8x512xf32>
    %47 = arith.mulf %44, %46 : vector<8x512xf32>
    %48 = tpu.concatenate %15, %19, %23, %27, %31, %35, %39, %43, %47 in 0 : vector<8x512xf32>, vector<8x512xf32>, vector<8x512xf32>, vector<8x512xf32>, vector<8x512xf32>, vector<8x512xf32>, vector<8x512xf32>, vector<8x512xf32>, vector<8x512xf32> -> vector<72x512xf32>
    %49 = arith.truncf %48 : vector<72x512xf32> to vector<72x512xbf16>
    %cst_27 = arith.constant dense<0.000000e+00> : vector<4x512xf32>
    %50 = tpu.matmul %11, %49, %cst_27 {dimension_numbers = #tpu.dot_dimension_numbers<[1], [0], [0], [1], [0, 0, 1, 1], [], []>} : vector<4x72xbf16>, vector<72x512xbf16>, vector<4x512xf32> -> vector<4x512xf32>
    %c0_28 = arith.constant 0 : index
    %c0_29 = arith.constant 0 : index
    %51 = vector.load %arg4[%c0_28, %c0_29] : memref<4x1xf32, #tpu.memory_space<vmem>>, vector<4x1xf32>
    %c0_30 = arith.constant 0 : index
    %c0_31 = arith.constant 0 : index
    %52 = vector.load %arg5[%c0_30, %c0_31] : memref<4x1xf32, #tpu.memory_space<vmem>>, vector<4x1xf32>
    %cst_32 = arith.constant dense<0.000000e+00> : vector<4xf32>
    %53 = vector.multi_reduction <add>, %50, %cst_32 [1] : vector<4x512xf32> to vector<4xf32>
    %54 = vector.shape_cast %53 : vector<4xf32> to vector<4x1xf32>
    %cst_33 = arith.constant 0.001953125 : f32
    %55 = vector.broadcast %cst_33 : f32 to vector<4x1xf32>
    %56 = arith.mulf %54, %55 : vector<4x1xf32>
    %57 = vector.broadcast %56 : vector<4x1xf32> to vector<4x512xf32>
    %58 = arith.subf %50, %57 : vector<4x512xf32>
    %59 = arith.mulf %58, %58 : vector<4x512xf32>
    %cst_34 = arith.constant dense<0.000000e+00> : vector<4xf32>
    %60 = vector.multi_reduction <add>, %59, %cst_34 [1] : vector<4x512xf32> to vector<4xf32>
    %61 = vector.shape_cast %60 : vector<4xf32> to vector<4x1xf32>
    %cst_35 = arith.constant 0.001953125 : f32
    %62 = vector.broadcast %cst_35 : f32 to vector<4x1xf32>
    %63 = arith.mulf %61, %62 : vector<4x1xf32>
    %cst_36 = arith.constant 9.99999974E-6 : f32
    %64 = vector.broadcast %cst_36 : f32 to vector<4x1xf32>
    %65 = arith.addf %63, %64 : vector<4x1xf32>
    %66 = math.rsqrt %65 : vector<4x1xf32>
    %67 = vector.broadcast %66 : vector<4x1xf32> to vector<4x512xf32>
    %68 = arith.mulf %58, %67 : vector<4x512xf32>
    %69 = vector.broadcast %51 : vector<4x1xf32> to vector<4x512xf32>
    %70 = arith.mulf %68, %69 : vector<4x512xf32>
    %71 = vector.broadcast %52 : vector<4x1xf32> to vector<4x512xf32>
    %72 = arith.addf %70, %71 : vector<4x512xf32>
    %cst_37 = arith.constant 0.000000e+00 : f32
    %73 = vector.broadcast %cst_37 : f32 to vector<4x512xf32>
    %74 = arith.maximumf %72, %73 : vector<4x512xf32>
    %c0_38 = arith.constant 0 : index
    %c17_39 = arith.constant 17 : index
    %75 = vector.load %arg11[%c0_38, %c17_39] : memref<8x546xf32, #tpu.memory_space<vmem>>, vector<4x512xf32>
    tpu.vector_store %arg11[%c0_38, %c17_39], %74 {strides = array<i32>} : memref<8x546xf32, #tpu.memory_space<vmem>>, vector<4x512xf32>,
    %cst_40 = arith.constant 0.000000e+00 : f32
    %76 = vector.broadcast %cst_40 : f32 to vector<4x512xf32>
    %c4_41 = arith.constant 4 : index
    %c17_42 = arith.constant 17 : index
    %77 = vector.load %arg11[%c4_41, %c17_42] : memref<8x546xf32, #tpu.memory_space<vmem>>, vector<4x512xf32>
    tpu.vector_store %arg11[%c4_41, %c17_42], %76 {strides = array<i32>} : memref<8x546xf32, #tpu.memory_space<vmem>>, vector<4x512xf32>,
    %c0_43 = arith.constant 0 : index
    %c0_44 = arith.constant 0 : index
    %78 = vector.load %arg6[%c0_43, %c0_44] : memref<4x72xbf16, #tpu.memory_space<vmem>>, vector<4x72xbf16>
    %c0_45 = arith.constant 0 : index
    %c0_46 = arith.constant 0 : index
    %79 = vector.load %arg11[%c0_45, %c0_46] : memref<8x546xf32, #tpu.memory_space<vmem>>, vector<8x512xf32>
    %80 = vector.extract_strided_slice %0 {offsets = [0, 0], sizes = [1, 512], strides = [1, 1]} : vector<9x512xf32> to vector<1x512xf32>
    %81 = vector.broadcast %80 : vector<1x512xf32> to vector<8x512xf32>
    %82 = arith.mulf %79, %81 : vector<8x512xf32>
    %c0_47 = arith.constant 0 : index
    %c1_48 = arith.constant 1 : index
    %83 = vector.load %arg11[%c0_47, %c1_48] : memref<8x546xf32, #tpu.memory_space<vmem>>, vector<8x512xf32>
    %84 = vector.extract_strided_slice %0 {offsets = [1, 0], sizes = [1, 512], strides = [1, 1]} : vector<9x512xf32> to vector<1x512xf32>
    %85 = vector.broadcast %84 : vector<1x512xf32> to vector<8x512xf32>
    %86 = arith.mulf %83, %85 : vector<8x512xf32>
    %c0_49 = arith.constant 0 : index
    %c2_50 = arith.constant 2 : index
    %87 = vector.load %arg11[%c0_49, %c2_50] : memref<8x546xf32, #tpu.memory_space<vmem>>, vector<8x512xf32>
    %88 = vector.extract_strided_slice %0 {offsets = [2, 0], sizes = [1, 512], strides = [1, 1]} : vector<9x512xf32> to vector<1x512xf32>
    %89 = vector.broadcast %88 : vector<1x512xf32> to vector<8x512xf32>
    %90 = arith.mulf %87, %89 : vector<8x512xf32>
    %c0_51 = arith.constant 0 : index
    %c16_52 = arith.constant 16 : index
    %91 = vector.load %arg11[%c0_51, %c16_52] : memref<8x546xf32, #tpu.memory_space<vmem>>, vector<8x512xf32>
    %92 = vector.extract_strided_slice %0 {offsets = [3, 0], sizes = [1, 512], strides = [1, 1]} : vector<9x512xf32> to vector<1x512xf32>
    %93 = vector.broadcast %92 : vector<1x512xf32> to vector<8x512xf32>
    %94 = arith.mulf %91, %93 : vector<8x512xf32>
    %c0_53 = arith.constant 0 : index
    %c17_54 = arith.constant 17 : index
    %95 = vector.load %arg11[%c0_53, %c17_54] : memref<8x546xf32, #tpu.memory_space<vmem>>, vector<8x512xf32>
    %96 = vector.extract_strided_slice %0 {offsets = [4, 0], sizes = [1, 512], strides = [1, 1]} : vector<9x512xf32> to vector<1x512xf32>
    %97 = vector.broadcast %96 : vector<1x512xf32> to vector<8x512xf32>
    %98 = arith.mulf %95, %97 : vector<8x512xf32>
    %c0_55 = arith.constant 0 : index
    %c18_56 = arith.constant 18 : index
    %99 = vector.load %arg11[%c0_55, %c18_56] : memref<8x546xf32, #tpu.memory_space<vmem>>, vector<8x512xf32>
    %100 = vector.extract_strided_slice %0 {offsets = [5, 0], sizes = [1, 512], strides = [1, 1]} : vector<9x512xf32> to vector<1x512xf32>
    %101 = vector.broadcast %100 : vector<1x512xf32> to vector<8x512xf32>
    %102 = arith.mulf %99, %101 : vector<8x512xf32>
    %c0_57 = arith.constant 0 : index
    %c32_58 = arith.constant 32 : index
    %103 = vector.load %arg11[%c0_57, %c32_58] : memref<8x546xf32, #tpu.memory_space<vmem>>, vector<8x512xf32>
    %104 = vector.extract_strided_slice %0 {offsets = [6, 0], sizes = [1, 512], strides = [1, 1]} : vector<9x512xf32> to vector<1x512xf32>
    %105 = vector.broadcast %104 : vector<1x512xf32> to vector<8x512xf32>
    %106 = arith.mulf %103, %105 : vector<8x512xf32>
    %c0_59 = arith.constant 0 : index
    %c33_60 = arith.constant 33 : index
    %107 = vector.load %arg11[%c0_59, %c33_60] : memref<8x546xf32, #tpu.memory_space<vmem>>, vector<8x512xf32>
    %108 = vector.extract_strided_slice %0 {offsets = [7, 0], sizes = [1, 512], strides = [1, 1]} : vector<9x512xf32> to vector<1x512xf32>
    %109 = vector.broadcast %108 : vector<1x512xf32> to vector<8x512xf32>
    %110 = arith.mulf %107, %109 : vector<8x512xf32>
    %c0_61 = arith.constant 0 : index
    %c34_62 = arith.constant 34 : index
    %111 = vector.load %arg11[%c0_61, %c34_62] : memref<8x546xf32, #tpu.memory_space<vmem>>, vector<8x512xf32>
    %112 = vector.extract_strided_slice %0 {offsets = [8, 0], sizes = [1, 512], strides = [1, 1]} : vector<9x512xf32> to vector<1x512xf32>
    %113 = vector.broadcast %112 : vector<1x512xf32> to vector<8x512xf32>
    %114 = arith.mulf %111, %113 : vector<8x512xf32>
    %115 = tpu.concatenate %82, %86, %90, %94, %98, %102, %106, %110, %114 in 0 : vector<8x512xf32>, vector<8x512xf32>, vector<8x512xf32>, vector<8x512xf32>, vector<8x512xf32>, vector<8x512xf32>, vector<8x512xf32>, vector<8x512xf32>, vector<8x512xf32> -> vector<72x512xf32>
    %116 = arith.truncf %115 : vector<72x512xf32> to vector<72x512xbf16>
    %cst_63 = arith.constant dense<0.000000e+00> : vector<4x512xf32>
    %117 = tpu.matmul %78, %116, %cst_63 {dimension_numbers = #tpu.dot_dimension_numbers<[1], [0], [0], [1], [0, 0, 1, 1], [], []>} : vector<4x72xbf16>, vector<72x512xbf16>, vector<4x512xf32> -> vector<4x512xf32>
    %c0_64 = arith.constant 0 : index
    %c0_65 = arith.constant 0 : index
    %118 = vector.load %arg7[%c0_64, %c0_65] : memref<4x1xf32, #tpu.memory_space<vmem>>, vector<4x1xf32>
    %c0_66 = arith.constant 0 : index
    %c0_67 = arith.constant 0 : index
    %119 = vector.load %arg8[%c0_66, %c0_67] : memref<4x1xf32, #tpu.memory_space<vmem>>, vector<4x1xf32>
    %cst_68 = arith.constant dense<0.000000e+00> : vector<4xf32>
    %120 = vector.multi_reduction <add>, %117, %cst_68 [1] : vector<4x512xf32> to vector<4xf32>
    %121 = vector.shape_cast %120 : vector<4xf32> to vector<4x1xf32>
    %cst_69 = arith.constant 0.001953125 : f32
    %122 = vector.broadcast %cst_69 : f32 to vector<4x1xf32>
    %123 = arith.mulf %121, %122 : vector<4x1xf32>
    %124 = vector.broadcast %123 : vector<4x1xf32> to vector<4x512xf32>
    %125 = arith.subf %117, %124 : vector<4x512xf32>
    %126 = arith.mulf %125, %125 : vector<4x512xf32>
    %cst_70 = arith.constant dense<0.000000e+00> : vector<4xf32>
    %127 = vector.multi_reduction <add>, %126, %cst_70 [1] : vector<4x512xf32> to vector<4xf32>
    %128 = vector.shape_cast %127 : vector<4xf32> to vector<4x1xf32>
    %cst_71 = arith.constant 0.001953125 : f32
    %129 = vector.broadcast %cst_71 : f32 to vector<4x1xf32>
    %130 = arith.mulf %128, %129 : vector<4x1xf32>
    %cst_72 = arith.constant 9.99999974E-6 : f32
    %131 = vector.broadcast %cst_72 : f32 to vector<4x1xf32>
    %132 = arith.addf %130, %131 : vector<4x1xf32>
    %133 = math.rsqrt %132 : vector<4x1xf32>
    %134 = vector.broadcast %133 : vector<4x1xf32> to vector<4x512xf32>
    %135 = arith.mulf %125, %134 : vector<4x512xf32>
    %136 = vector.broadcast %118 : vector<4x1xf32> to vector<4x512xf32>
    %137 = arith.mulf %135, %136 : vector<4x512xf32>
    %138 = vector.broadcast %119 : vector<4x1xf32> to vector<4x512xf32>
    %139 = arith.addf %137, %138 : vector<4x512xf32>
    %cst_73 = arith.constant 0.000000e+00 : f32
    %140 = vector.broadcast %cst_73 : f32 to vector<4x512xf32>
    %141 = arith.maximumf %139, %140 : vector<4x512xf32>
    %c0_74 = arith.constant 0 : index
    %c0_75 = arith.constant 0 : index
    %142 = vector.load %arg10[%c0_74, %c0_75] : memref<4x512xf32, #tpu.memory_space<vmem>>, vector<4x512xf32>
    tpu.vector_store %arg10[%c0_74, %c0_75], %141 {strides = array<i32>} : memref<4x512xf32, #tpu.memory_space<vmem>>, vector<4x512xf32>,
    return
  }
}

</mosaic_0001>

<llo_original>
// kernel: tpu_custom_call.1
$region0: #{tpu_custom_call.1}
  #allocation0 [shape = 'u32[]', space=smem, size = 0x4, offset = 0x4, fixed_abs, tag = 'smem constant byte address 0x4 - core index']
  #allocation1 [shape = 'u32[144,128]{1,0:T(1,128)}', space=vmem, size = 0x12000, scoped, tag = 'internal scratch']
  #allocation2 [shape = 'f32[8,546]{1,0:T(8,128)}', space=vmem, size = 0x5000, scoped, tag = 'scratch operand']
  %s0 = inlined_call_operand.vmem [shape: f32[4,128], index: 0, kind: input, shape index: {}]
  %s1 = inlined_call_operand.vmem [shape: f32[4,512], index: 1, kind: input, shape index: {}]
  %s2 = inlined_call_operand.hbm [shape: f32[128,512], index: 2, kind: input, shape index: {}]
  %s3 = inlined_call_operand.vmem [shape: bf16[4,72], index: 3, kind: input, shape index: {}]
  %s4 = inlined_call_operand.vmem [shape: f32[4,1], index: 4, kind: input, shape index: {}]
  %s5 = inlined_call_operand.vmem [shape: f32[4,1], index: 5, kind: input, shape index: {}]
  %s6 = inlined_call_operand.vmem [shape: bf16[4,72], index: 6, kind: input, shape index: {}]
  %s7 = inlined_call_operand.vmem [shape: f32[4,1], index: 7, kind: input, shape index: {}]
  %s8 = inlined_call_operand.vmem [shape: f32[4,1], index: 8, kind: input, shape index: {}]
  %s9 = inlined_call_operand.hbm [shape: f32[9,512], index: 9, kind: input, shape index: {}]
  %s10 = inlined_call_operand.hbm [shape: f32[4,512], index: 10, kind: output, shape index: {}]
  %s11 = sld [smem:[#allocation0]]
  $region58: #{tpu_custom_call.1} parent=0
    _
  %s13 = ssub.s32 1, %s11
  %s14 = scalar_select 0, %s13, %s11
  $region1: #{tpu_custom_call.1} parent=0
    #allocation3 [shape = 'u8[262144]{0}', space=vmem, size = 0x40000, scoped, tag = 'input window, operand 2, single buffered']
    #allocation4 [shape = 's32[1]{0}', space=sflag, size = 0x4, scoped, tag = 'scoped memory for tpu_custom_call.1']
    #allocation5 [shape = 's32[1]{0}', space=sflag, size = 0x4, scoped, tag = 'scoped memory for tpu_custom_call.1']
    #allocation6 [shape = 'u8[32768]{0}', space=vmem, size = 0x8000, scoped, tag = 'input window, operand 9, single buffered']
    #allocation7 [shape = 's32[1]{0}', space=sflag, size = 0x4, scoped, tag = 'scoped memory for tpu_custom_call.1']
    #allocation8 [shape = 'u8[8192]{0}', space=vmem, size = 0x2000, scoped, tag = 'output window, operand 0, single buffered']
    %15 = vsyncpa [#allocation4], 0
    %16 = vsyncpa [#allocation7], 0
    %17 = vsyncpa [#allocation5], 0
    // Predicated region
    $region2: #{tpu_custom_call.1} parent=1 // pred_check
      _
    $region3: #{tpu_custom_call.1} parent=1 // pred_check_branch
      %19 = sbr.rel (0) target = $region5
    $region4: #{tpu_custom_call.1} parent=1 // pred_region
      _
    $region5: #{tpu_custom_call.1} parent=1 // pred_fallthru
      _
    // Predicated region
    $region6: #{tpu_custom_call.1} parent=1 // pred_check
      _
    $region7: #{tpu_custom_call.1} parent=1 // pred_check_branch
      %21 = sbr.rel (0) target = $region9
    $region8: #{tpu_custom_call.1} parent=1 // pred_region
      _
    $region9: #{tpu_custom_call.1} parent=1 // pred_fallthru
      _
    // Predicated region
    $region10: #{tpu_custom_call.1} parent=1 // pred_check
      _
    $region11: #{tpu_custom_call.1} parent=1 // pred_check_branch
      %23 = sbr.rel (0) target = $region13
    $region12: #{tpu_custom_call.1} parent=1 // pred_region
      %s25 = ssub.s32 8192, 8192
      %26 = vsyncadd [#allocation4], %s25
      %s27 = sshll.u32 [#allocation3], 4
      %s28 = int_to_ptr.vmem [resolvable:$true] %s27
      %33 = dma.hbm_to_vmem [thread:$0]  %s2, 8192, %s28, [#allocation4], 512, 512, 32
    $region13: #{tpu_custom_call.1} parent=1 // pred_fallthru
      _
    // Predicated region
    $region14: #{tpu_custom_call.1} parent=1 // pred_check
      _
    $region15: #{tpu_custom_call.1} parent=1 // pred_check_branch
      %35 = sbr.rel (0) target = $region17
    $region16: #{tpu_custom_call.1} parent=1 // pred_region
      _
    $region17: #{tpu_custom_call.1} parent=1 // pred_fallthru
      _
    // Predicated region
    $region18: #{tpu_custom_call.1} parent=1 // pred_check
      _
    $region19: #{tpu_custom_call.1} parent=1 // pred_check_branch
      %37 = sbr.rel (0) target = $region21
    $region20: #{tpu_custom_call.1} parent=1 // pred_region
      _
    $region21: #{tpu_custom_call.1} parent=1 // pred_fallthru
      _
    // Predicated region
    $region22: #{tpu_custom_call.1} parent=1 // pred_check
      _
    $region23: #{tpu_custom_call.1} parent=1 // pred_check_branch
      %39 = sbr.rel (0) target = $region25
    $region24: #{tpu_custom_call.1} parent=1 // pred_region
      _
    $region25: #{tpu_custom_call.1} parent=1 // pred_fallthru
      _
    // Predicated region
    $region26: #{tpu_custom_call.1} parent=1 // pred_check
      _
    $region27: #{tpu_custom_call.1} parent=1 // pred_check_branch
      %41 = sbr.rel (0) target = $region29
    $region28: #{tpu_custom_call.1} parent=1 // pred_region
      _
    $region29: #{tpu_custom_call.1} parent=1 // pred_fallthru
      _
    // Predicated region
    $region30: #{tpu_custom_call.1} parent=1 // pred_check
      _
    $region31: #{tpu_custom_call.1} parent=1 // pred_check_branch
      %43 = sbr.rel (0) target = $region33
    $region32: #{tpu_custom_call.1} parent=1 // pred_region
      _
    $region33: #{tpu_custom_call.1} parent=1 // pred_fallthru
      _
    // Predicated region
    $region34: #{tpu_custom_call.1} parent=1 // pred_check
      _
    $region35: #{tpu_custom_call.1} parent=1 // pred_check_branch
      %45 = sbr.rel (0) target = $region37
    $region36: #{tpu_custom_call.1} parent=1 // pred_region
      _
    $region37: #{tpu_custom_call.1} parent=1 // pred_fallthru
      _
    // Predicated region
    $region38: #{tpu_custom_call.1} parent=1 // pred_check
      _
    $region39: #{tpu_custom_call.1} parent=1 // pred_check_branch
      %47 = sbr.rel (0) target = $region41
    $region40: #{tpu_custom_call.1} parent=1 // pred_region
      %s49 = ssub.s32 1024, 1024
      %50 = vsyncadd [#allocation7], %s49
      %s51 = sshll.u32 [#allocation6], 4
      %s52 = int_to_ptr.vmem [resolvable:$true] %s51
      %57 = dma.hbm_to_vmem [thread:$0]  %s9, 1024, %s52, [#allocation7], 512, 512, 32
    $region41: #{tpu_custom_call.1} parent=1 // pred_fallthru
      _
    // Predicated region
    $region42: #{tpu_custom_call.1} parent=1 // pred_check
      _
    $region43: #{tpu_custom_call.1} parent=1 // pred_check_branch
      %59 = sbr.rel (0) target = $region45
    $region44: #{tpu_custom_call.1} parent=1 // pred_region
      %60 = dma.done [#allocation4], 8192
    $region45: #{tpu_custom_call.1} parent=1 // pred_fallthru
      _
    // Predicated region
    $region46: #{tpu_custom_call.1} parent=1 // pred_check
      _
    $region47: #{tpu_custom_call.1} parent=1 // pred_check_branch
      %62 = sbr.rel (0) target = $region49
    $region48: #{tpu_custom_call.1} parent=1 // pred_region
      %63 = dma.done [#allocation7], 1024
    $region49: #{tpu_custom_call.1} parent=1 // pred_fallthru
      _
    %v65 = vld [vmem:[#allocation6] sm:$0xff]
    %v66 = vld [vmem:[#allocation6 + $0x8] sm:$0xff]
    %v67 = vld [vmem:[#allocation6 + $0x10] sm:$0xff]
    %v68 = vld [vmem:[#allocation6 + $0x18] sm:$0xff]
    %v69 = vld [vmem:[#allocation6 + $0x20] sm:$0x1]
    %v70 = vld [vmem:[#allocation6 + $0x28] sm:$0x1]
    %v71 = vld [vmem:[#allocation6 + $0x30] sm:$0x1]
    %v72 = vld [vmem:[#allocation6 + $0x38] sm:$0x1]
    %vm73 = vcmask 138240
    %74 = vst.msk [vmem:[#allocation2] sm:$0xff] %vm73, 0.0
    %vm75 = vcmask 277640
    %76 = vst.msk [vmem:[#allocation2 + $0x20] sm:$0xff] %vm75, 0.0
    %v77 = vld [vmem:[%s0] sm:$0xf]
    %v78 = vld [vmem:[#allocation3] sm:$0xff]
    %v79 = vld [vmem:[#allocation3 + $0x8] sm:$0xff]
    %v80 = vld [vmem:[#allocation3 + $0x10] sm:$0xff]
    %v81 = vld [vmem:[#allocation3 + $0x18] sm:$0xff]
    %v82 = vld [vmem:[#allocation3 + $0x20] sm:$0xff]
    %v83 = vld [vmem:[#allocation3 + $0x28] sm:$0xff]
    %v84 = vld [vmem:[#allocation3 + $0x30] sm:$0xff]
    %v85 = vld [vmem:[#allocation3 + $0x38] sm:$0xff]
    %v86 = vld [vmem:[#allocation3 + $0x40] sm:$0xff]
    %v87 = vld [vmem:[#allocation3 + $0x48] sm:$0xff]
    %v88 = vld [vmem:[#allocation3 + $0x50] sm:$0xff]
    %v89 = vld [vmem:[#allocation3 + $0x58] sm:$0xff]
    %v90 = vld [vmem:[#allocation3 + $0x60] sm:$0xff]
    %v91 = vld [vmem:[#allocation3 + $0x68] sm:$0xff]
    %v92 = vld [vmem:[#allocation3 + $0x70] sm:$0xff]
    %v93 = vld [vmem:[#allocation3 + $0x78] sm:$0xff]
    %v94 = vld [vmem:[#allocation3 + $0x80] sm:$0xff]
    %v95 = vld [vmem:[#allocation3 + $0x88] sm:$0xff]
    %v96 = vld [vmem:[#allocation3 + $0x90] sm:$0xff]
    %v97 = vld [vmem:[#allocation3 + $0x98] sm:$0xff]
    %v98 = vld [vmem:[#allocation3 + $0xa0] sm:$0xff]
    %v99 = vld [vmem:[#allocation3 + $0xa8] sm:$0xff]
    %v100 = vld [vmem:[#allocation3 + $0xb0] sm:$0xff]
    %v101 = vld [vmem:[#allocation3 + $0xb8] sm:$0xff]
    %v102 = vld [vmem:[#allocation3 + $0xc0] sm:$0xff]
    %v103 = vld [vmem:[#allocation3 + $0xc8] sm:$0xff]
    %v104 = vld [vmem:[#allocation3 + $0xd0] sm:$0xff]
    %v105 = vld [vmem:[#allocation3 + $0xd8] sm:$0xff]
    %v106 = vld [vmem:[#allocation3 + $0xe0] sm:$0xff]
    %v107 = vld [vmem:[#allocation3 + $0xe8] sm:$0xff]
    %v108 = vld [vmem:[#allocation3 + $0xf0] sm:$0xff]
    %v109 = vld [vmem:[#allocation3 + $0xf8] sm:$0xff]
    %v110 = vld [vmem:[#allocation3 + $0x100] sm:$0xff]
    %v111 = vld [vmem:[#allocation3 + $0x108] sm:$0xff]
    %v112 = vld [vmem:[#allocation3 + $0x110] sm:$0xff]
    %v113 = vld [vmem:[#allocation3 + $0x118] sm:$0xff]
    %v114 = vld [vmem:[#allocation3 + $0x120] sm:$0xff]
    %v115 = vld [vmem:[#allocation3 + $0x128] sm:$0xff]
    %v116 = vld [vmem:[#allocation3 + $0x130] sm:$0xff]
    %v117 = vld [vmem:[#allocation3 + $0x138] sm:$0xff]
    %v118 = vld [vmem:[#allocation3 + $0x140] sm:$0xff]
    %v119 = vld [vmem:[#allocation3 + $0x148] sm:$0xff]
    %v120 = vld [vmem:[#allocation3 + $0x150] sm:$0xff]
    %v121 = vld [vmem:[#allocation3 + $0x158] sm:$0xff]
    %v122 = vld [vmem:[#allocation3 + $0x160] sm:$0xff]
    %v123 = vld [vmem:[#allocation3 + $0x168] sm:$0xff]
    %v124 = vld [vmem:[#allocation3 + $0x170] sm:$0xff]
    %v125 = vld [vmem:[#allocation3 + $0x178] sm:$0xff]
    %v126 = vld [vmem:[#allocation3 + $0x180] sm:$0xff]
    %v127 = vld [vmem:[#allocation3 + $0x188] sm:$0xff]
    %v128 = vld [vmem:[#allocation3 + $0x190] sm:$0xff]
    %v129 = vld [vmem:[#allocation3 + $0x198] sm:$0xff]
    %v130 = vld [vmem:[#allocation3 + $0x1a0] sm:$0xff]
    %v131 = vld [vmem:[#allocation3 + $0x1a8] sm:$0xff]
    %v132 = vld [vmem:[#allocation3 + $0x1b0] sm:$0xff]
    %v133 = vld [vmem:[#allocation3 + $0x1b8] sm:$0xff]
    %v134 = vld [vmem:[#allocation3 + $0x1c0] sm:$0xff]
    %v135 = vld [vmem:[#allocation3 + $0x1c8] sm:$0xff]
    %v136 = vld [vmem:[#allocation3 + $0x1d0] sm:$0xff]
    %v137 = vld [vmem:[#allocation3 + $0x1d8] sm:$0xff]
    %v138 = vld [vmem:[#allocation3 + $0x1e0] sm:$0xff]
    %v139 = vld [vmem:[#allocation3 + $0x1e8] sm:$0xff]
    %v140 = vld [vmem:[#allocation3 + $0x1f0] sm:$0xff]
    %v141 = vld [vmem:[#allocation3 + $0x1f8] sm:$0xff]
    %142 = vmatprep.subr.mxu0 %v79
    %143 = vmatpush1.msra.mxu0 %v78
    %144 = vmatprep.subr.mxu0 %v83
    %145 = vmatpush1.msra.mxu0 %v82
    %146 = vmatprep.subr.mxu0 %v87
    %147 = vmatpush1.msra.mxu0 %v86
    %148 = vmatprep.subr.mxu0 %v91
    %149 = vmatpush1.msra.mxu0 %v90
    %150 = vmatprep.subr.mxu0 %v95
    %151 = vmatpush1.msra.mxu0 %v94
    %152 = vmatprep.subr.mxu0 %v99
    %153 = vmatpush1.msra.mxu0 %v98
    %154 = vmatprep.subr.mxu0 %v103
    %155 = vmatpush1.msra.mxu0 %v102
    %156 = vmatprep.subr.mxu0 %v107
    %157 = vmatpush1.msra.mxu0 %v106
    %158 = vmatprep.subr.mxu0 %v111
    %159 = vmatpush1.msra.mxu0 %v110
    %160 = vmatprep.subr.mxu0 %v115
    %161 = vmatpush1.msra.mxu0 %v114
    %162 = vmatprep.subr.mxu0 %v119
    %163 = vmatpush1.msra.mxu0 %v118
    %164 = vmatprep.subr.mxu0 %v123
    %165 = vmatpush1.msra.mxu0 %v122
    %166 = vmatprep.subr.mxu0 %v127
    %167 = vmatpush1.msra.mxu0 %v126
    %168 = vmatprep.subr.mxu0 %v131
    %169 = vmatpush1.msra.mxu0 %v130
    %170 = vmatprep.subr.mxu0 %v135
    %171 = vmatpush1.msra.mxu0 %v134
    %172 = vmatprep.subr.mxu0 %v139
    %173 = vmatpush1.msra.mxu0 %v138
    %174 = vmatprep.subr.mxu0 0.0
    %175 = vmatpush1.msra.mxu0 0.0
    %176 = vmatprep.subr.mxu0 0.0
    %177 = vmatpush1.msra.mxu0 0.0
    %178 = vmatprep.subr.mxu0 0.0
    %179 = vmatpush1.msra.mxu0 0.0
    %180 = vmatprep.subr.mxu0 0.0
    %181 = vmatpush1.msra.mxu0 0.0
    %182 = vmatprep.subr.mxu0 0.0
    %183 = vmatpush1.msra.mxu0 0.0
    %184 = vmatprep.subr.mxu0 0.0
    %185 = vmatpush1.msra.mxu0 0.0
    %186 = vmatprep.subr.mxu0 0.0
    %187 = vmatpush1.msra.mxu0 0.0
    %188 = vmatprep.subr.mxu0 0.0
    %189 = vmatpush1.msra.mxu0 0.0
    %190 = vmatprep.subr.mxu0 0.0
    %191 = vmatpush1.msra.mxu0 0.0
    %192 = vmatprep.subr.mxu0 0.0
    %193 = vmatpush1.msra.mxu0 0.0
    %194 = vmatprep.subr.mxu0 0.0
    %195 = vmatpush1.msra.mxu0 0.0
    %196 = vmatprep.subr.mxu0 0.0
    %197 = vmatpush1.msra.mxu0 0.0
    %198 = vmatprep.subr.mxu0 0.0
    %199 = vmatpush1.msra.mxu0 0.0
    %200 = vmatprep.subr.mxu0 0.0
    %201 = vmatpush1.msra.mxu0 0.0
    %202 = vmatprep.subr.mxu0 0.0
    %203 = vmatpush1.msra.mxu0 0.0
    %204 = vmatprep.subr.mxu0 0.0
    %205 = vmatpush1.msra.mxu0 0.0
    %206 = vmatprep.mubr.f32.mxu0 0.0
    %207 = vmatmul.mubr.f32.gmra.mrb[0].mxu0 %v77
    %v208 = vpop.f32.mrb[0].mxu0
    %v209 = vadd.f32 0.0, %v208
    %v210 = vpop.f32.mrb[0].mxu0
    %v211 = vadd.f32 0.0, %v210
    %212 = vdwg.mxu0
    %213 = vmatprep.subr.mxu0 %v81
    %214 = vmatpush1.msra.mxu0 %v80
    %215 = vmatprep.subr.mxu0 %v85
    %216 = vmatpush1.msra.mxu0 %v84
    %217 = vmatprep.subr.mxu0 %v89
    %218 = vmatpush1.msra.mxu0 %v88
    %219 = vmatprep.subr.mxu0 %v93
    %220 = vmatpush1.msra.mxu0 %v92
    %221 = vmatprep.subr.mxu0 %v97
    %222 = vmatpush1.msra.mxu0 %v96
    %223 = vmatprep.subr.mxu0 %v101
    %224 = vmatpush1.msra.mxu0 %v100
    %225 = vmatprep.subr.mxu0 %v105
    %226 = vmatpush1.msra.mxu0 %v104
    %227 = vmatprep.subr.mxu0 %v109
    %228 = vmatpush1.msra.mxu0 %v108
    %229 = vmatprep.subr.mxu0 %v113
    %230 = vmatpush1.msra.mxu0 %v112
    %231 = vmatprep.subr.mxu0 %v117
    %232 = vmatpush1.msra.mxu0 %v116
    %233 = vmatprep.subr.mxu0 %v121
    %234 = vmatpush1.msra.mxu0 %v120
    %235 = vmatprep.subr.mxu0 %v125
    %236 = vmatpush1.msra.mxu0 %v124
    %237 = vmatprep.subr.mxu0 %v129
    %238 = vmatpush1.msra.mxu0 %v128
    %239 = vmatprep.subr.mxu0 %v133
    %240 = vmatpush1.msra.mxu0 %v132
    %241 = vmatprep.subr.mxu0 %v137
    %242 = vmatpush1.msra.mxu0 %v136
    %243 = vmatprep.subr.mxu0 %v141
    %244 = vmatpush1.msra.mxu0 %v140
    %245 = vmatprep.subr.mxu0 0.0
    %246 = vmatpush1.msra.mxu0 0.0
    %247 = vmatprep.subr.mxu0 0.0
    %248 = vmatpush1.msra.mxu0 0.0
    %249 = vmatprep.subr.mxu0 0.0
    %250 = vmatpush1.msra.mxu0 0.0
    %251 = vmatprep.subr.mxu0 0.0
    %252 = vmatpush1.msra.mxu0 0.0
    %253 = vmatprep.subr.mxu0 0.0
    %254 = vmatpush1.msra.mxu0 0.0
    %255 = vmatprep.subr.mxu0 0.0
    %256 = vmatpush1.msra.mxu0 0.0
    %257 = vmatprep.subr.mxu0 0.0
    %258 = vmatpush1.msra.mxu0 0.0
    %259 = vmatprep.subr.mxu0 0.0
    %260 = vmatpush1.msra.mxu0 0.0
    %261 = vmatprep.subr.mxu0 0.0
    %262 = vmatpush1.msra.mxu0 0.0
    %263 = vmatprep.subr.mxu0 0.0
    %264 = vmatpush1.msra.mxu0 0.0
    %265 = vmatprep.subr.mxu0 0.0
    %266 = vmatpush1.msra.mxu0 0.0
    %267 = vmatprep.subr.mxu0 0.0
    %268 = vmatpush1.msra.mxu0 0.0
    %269 = vmatprep.subr.mxu0 0.0
    %270 = vmatpush1.msra.mxu0 0.0
    %271 = vmatprep.subr.mxu0 0.0
    %272 = vmatpush1.msra.mxu0 0.0
    %273 = vmatprep.subr.mxu0 0.0
    %274 = vmatpush1.msra.mxu0 0.0
    %275 = vmatprep.subr.mxu0 0.0
    %276 = vmatpush1.msra.mxu0 0.0
    %277 = vmatprep.mubr.f32.mxu0 0.0
    %278 = vmatmul.mubr.f32.gmra.mrb[0].mxu0 %v77
    %v279 = vpop.f32.mrb[0].mxu0
    %v280 = vadd.f32 0.0, %v279
    %v281 = vpop.f32.mrb[0].mxu0
    %v282 = vadd.f32 0.0, %v281
    %283 = vdwg.mxu0
    %v284 = vld [vmem:[%s1] sm:$0xff]
    %v285 = vld [vmem:[%s1 + $0x8] sm:$0xff]
    %v288 = vcombine.high %v284, %v284
    %v289 = vcombine.high %v285, %v285
    %290 = vrot.lane.b32.xlu0 %v284, 17
    %v291 = vpop.permute.xlu0 %290
    %292 = vrot.lane.b32.xlu0 %v288, 17
    %v293 = vpop.permute.xlu0 %292
    %294 = vrot.lane.b32.xlu0 %v285, 17
    %v295 = vpop.permute.xlu0 %294
    %296 = vrot.lane.b32.xlu0 %v289, 17
    %v297 = vpop.permute.xlu0 %296
    %v298 = vsel %vm73, %v291, %v293
    %v299 = vsel %vm73, %v293, %v295
    %v300 = vsel %vm73, %v295, %v297
    %vm306 = vcmask 1043592
    %307 = vst.msk [vmem:[#allocation2] sm:$0xf] %vm306, %v291
    %308 = vst [vmem:[#allocation2 + $0x8] sm:$0xf] %v298
    %309 = vst [vmem:[#allocation2 + $0x10] sm:$0xf] %v299
    %310 = vst [vmem:[#allocation2 + $0x18] sm:$0xf] %v300
    %vm311 = vcmask 134144
    %312 = vst.msk [vmem:[#allocation2 + $0x20] sm:$0xf] %vm311, %v297
    %v317 = vrot.slane %v209, 4
    %v318 = vrot.slane %v211, 4
    %v319 = vrot.slane %v280, 4
    %v320 = vrot.slane %v282, 4
    %321 = vrot.lane.b32.xlu0 %v317, 17
    %v322 = vpop.permute.xlu0 %321
    %323 = vrot.lane.b32.xlu0 %v318, 17
    %v324 = vpop.permute.xlu0 %323
    %325 = vrot.lane.b32.xlu0 %v319, 17
    %v326 = vpop.permute.xlu0 %325
    %327 = vrot.lane.b32.xlu0 %v320, 17
    %v328 = vpop.permute.xlu0 %327
    %v329 = vsel %vm73, %v322, %v324
    %v330 = vsel %vm73, %v324, %v326
    %v331 = vsel %vm73, %v326, %v328
    %vm337 = vcmask 1047692
    %338 = vst.msk [vmem:[#allocation2] sm:$0xf0] %vm337, %v322
    %339 = vst [vmem:[#allocation2 + $0x8] sm:$0xf0] %v329
    %340 = vst [vmem:[#allocation2 + $0x10] sm:$0xf0] %v330
    %341 = vst [vmem:[#allocation2 + $0x18] sm:$0xf0] %v331
    %vm342 = vcmask 138244
    %343 = vst.msk [vmem:[#allocation2 + $0x20] sm:$0xf0] %vm342, %v328
    %v344 = vld [vmem:[%s3] sm:$0x3]
    %v345 = vld [vmem:[#allocation2] sm:$0xff]
    %v346 = vld [vmem:[#allocation2 + $0x8] sm:$0xff]
    %v347 = vld [vmem:[#allocation2 + $0x10] sm:$0xff]
    %v348 = vld [vmem:[#allocation2 + $0x18] sm:$0xff]
    %v349 = vlaneseq
    %v350 = vshrl.u32 %v349, 7
    %v351 = vsub.s32 0, %v350
    %v352 = vrot.slane %v65, %v351
    %v353 = vlaneseq
    %v354 = vshrl.u32 %v353, 7
    %v355 = vsub.s32 0, %v354
    %v356 = vrot.slane %v66, %v355
    %v357 = vlaneseq
    %v358 = vshrl.u32 %v357, 7
    %v359 = vsub.s32 0, %v358
    %v360 = vrot.slane %v67, %v359
    %v361 = vlaneseq
    %v362 = vshrl.u32 %v361, 7
    %v363 = vsub.s32 0, %v362
    %v364 = vrot.slane %v68, %v363
    %v365 = vmul.f32 %v345, %v352
    %v366 = vmul.f32 %v346, %v356
    %v367 = vmul.f32 %v347, %v360
    %v368 = vmul.f32 %v348, %v364
    %v369 = vld [vmem:[#allocation2 + $0x20] sm:$0xff]
    %v370 = vlaneseq
    %v371 = vshrl.u32 %v370, 7
    %v372 = vsub.s32 1, %v371
    %v373 = vrot.slane %v65, %v372
    %v374 = vlaneseq
    %v375 = vshrl.u32 %v374, 7
    %v376 = vsub.s32 1, %v375
    %v377 = vrot.slane %v66, %v376
    %v378 = vlaneseq
    %v379 = vshrl.u32 %v378, 7
    %v380 = vsub.s32 1, %v379
    %v381 = vrot.slane %v67, %v380
    %v382 = vlaneseq
    %v383 = vshrl.u32 %v382, 7
    %v384 = vsub.s32 1, %v383
    %v385 = vrot.slane %v68, %v384
    %390 = vrot.lane.b32.xlu0 %v373, 1
    %v391 = vpop.permute.xlu0 %390
    %392 = vrot.lane.b32.xlu0 %v377, 1
    %v393 = vpop.permute.xlu0 %392
    %394 = vrot.lane.b32.xlu0 %v381, 1
    %v395 = vpop.permute.xlu0 %394
    %396 = vrot.lane.b32.xlu0 %v385, 1
    %v397 = vpop.permute.xlu0 %396
    %vm398 = vcmask 7168
    %v399 = vsel %vm398, %v391, %v393
    %v400 = vsel %vm398, %v393, %v395
    %v401 = vsel %vm398, %v395, %v397
    %v407 = vmul.f32 %v345, %v391
    %v408 = vmul.f32 %v346, %v399
    %v409 = vmul.f32 %v347, %v400
    %v410 = vmul.f32 %v348, %v401
    %v411 = vmul.f32 %v369, %v397
    %v412 = vlaneseq
    %v413 = vshrl.u32 %v412, 7
    %v414 = vsub.s32 2, %v413
    %v415 = vrot.slane %v65, %v414
    %v416 = vlaneseq
    %v417 = vshrl.u32 %v416, 7
    %v418 = vsub.s32 2, %v417
    %v419 = vrot.slane %v66, %v418
    %v420 = vlaneseq
    %v421 = vshrl.u32 %v420, 7
    %v422 = vsub.s32 2, %v421
    %v423 = vrot.slane %v67, %v422
    %v424 = vlaneseq
    %v425 = vshrl.u32 %v424, 7
    %v426 = vsub.s32 2, %v425
    %v427 = vrot.slane %v68, %v426
    %432 = vrot.lane.b32.xlu0 %v415, 2
    %v433 = vpop.permute.xlu0 %432
    %434 = vrot.lane.b32.xlu0 %v419, 2
    %v435 = vpop.permute.xlu0 %434
    %436 = vrot.lane.b32.xlu0 %v423, 2
    %v437 = vpop.permute.xlu0 %436
    %438 = vrot.lane.b32.xlu0 %v427, 2
    %v439 = vpop.permute.xlu0 %438
    %vm440 = vcmask 15360
    %v441 = vsel %vm440, %v433, %v435
    %v442 = vsel %vm440, %v435, %v437
    %v443 = vsel %vm440, %v437, %v439
    %v449 = vmul.f32 %v345, %v433
    %v450 = vmul.f32 %v346, %v441
    %v451 = vmul.f32 %v347, %v442
    %v452 = vmul.f32 %v348, %v443
    %v453 = vmul.f32 %v369, %v439
    %v454 = vlaneseq
    %v455 = vshrl.u32 %v454, 7
    %v456 = vsub.s32 3, %v455
    %v457 = vrot.slane %v65, %v456
    %v458 = vlaneseq
    %v459 = vshrl.u32 %v458, 7
    %v460 = vsub.s32 3, %v459
    %v461 = vrot.slane %v66, %v460
    %v462 = vlaneseq
    %v463 = vshrl.u32 %v462, 7
    %v464 = vsub.s32 3, %v463
    %v465 = vrot.slane %v67, %v464
    %v466 = vlaneseq
    %v467 = vshrl.u32 %v466, 7
    %v468 = vsub.s32 3, %v467
    %v469 = vrot.slane %v68, %v468
    %474 = vrot.lane.b32.xlu0 %v457, 16
    %v475 = vpop.permute.xlu0 %474
    %476 = vrot.lane.b32.xlu0 %v461, 16
    %v477 = vpop.permute.xlu0 %476
    %478 = vrot.lane.b32.xlu0 %v465, 16
    %v479 = vpop.permute.xlu0 %478
    %480 = vrot.lane.b32.xlu0 %v469, 16
    %v481 = vpop.permute.xlu0 %480
    %vm482 = vcmask 130048
    %v483 = vsel %vm482, %v475, %v477
    %v484 = vsel %vm482, %v477, %v479
    %v485 = vsel %vm482, %v479, %v481
    %v491 = vmul.f32 %v345, %v475
    %v492 = vmul.f32 %v346, %v483
    %v493 = vmul.f32 %v347, %v484
    %v494 = vmul.f32 %v348, %v485
    %v495 = vmul.f32 %v369, %v481
    %v496 = vlaneseq
    %v497 = vshrl.u32 %v496, 7
    %v498 = vsub.s32 4, %v497
    %v499 = vrot.slane %v65, %v498
    %v500 = vlaneseq
    %v501 = vshrl.u32 %v500, 7
    %v502 = vsub.s32 4, %v501
    %v503 = vrot.slane %v66, %v502
    %v504 = vlaneseq
    %v505 = vshrl.u32 %v504, 7
    %v506 = vsub.s32 4, %v505
    %v507 = vrot.slane %v67, %v506
    %v508 = vlaneseq
    %v509 = vshrl.u32 %v508, 7
    %v510 = vsub.s32 4, %v509
    %v511 = vrot.slane %v68, %v510
    %516 = vrot.lane.b32.xlu0 %v499, 17
    %v517 = vpop.permute.xlu0 %516
    %518 = vrot.lane.b32.xlu0 %v503, 17
    %v519 = vpop.permute.xlu0 %518
    %520 = vrot.lane.b32.xlu0 %v507, 17
    %v521 = vpop.permute.xlu0 %520
    %522 = vrot.lane.b32.xlu0 %v511, 17
    %v523 = vpop.permute.xlu0 %522
    %v524 = vsel %vm73, %v517, %v519
    %v525 = vsel %vm73, %v519, %v521
    %v526 = vsel %vm73, %v521, %v523
    %v532 = vmul.f32 %v345, %v517
    %v533 = vmul.f32 %v346, %v524
    %v534 = vmul.f32 %v347, %v525
    %v535 = vmul.f32 %v348, %v526
    %v536 = vmul.f32 %v369, %v523
    %v537 = vlaneseq
    %v538 = vshrl.u32 %v537, 7
    %v539 = vsub.s32 5, %v538
    %v540 = vrot.slane %v65, %v539
    %v541 = vlaneseq
    %v542 = vshrl.u32 %v541, 7
    %v543 = vsub.s32 5, %v542
    %v544 = vrot.slane %v66, %v543
    %v545 = vlaneseq
    %v546 = vshrl.u32 %v545, 7
    %v547 = vsub.s32 5, %v546
    %v548 = vrot.slane %v67, %v547
    %v549 = vlaneseq
    %v550 = vshrl.u32 %v549, 7
    %v551 = vsub.s32 5, %v550
    %v552 = vrot.slane %v68, %v551
    %557 = vrot.lane.b32.xlu0 %v540, 18
    %v558 = vpop.permute.xlu0 %557
    %559 = vrot.lane.b32.xlu0 %v544, 18
    %v560 = vpop.permute.xlu0 %559
    %561 = vrot.lane.b32.xlu0 %v548, 18
    %v562 = vpop.permute.xlu0 %561
    %563 = vrot.lane.b32.xlu0 %v552, 18
    %v564 = vpop.permute.xlu0 %563
    %vm565 = vcmask 146432
    %v566 = vsel %vm565, %v558, %v560
    %v567 = vsel %vm565, %v560, %v562
    %v568 = vsel %vm565, %v562, %v564
    %v574 = vmul.f32 %v345, %v558
    %v575 = vmul.f32 %v346, %v566
    %v576 = vmul.f32 %v347, %v567
    %v577 = vmul.f32 %v348, %v568
    %v578 = vmul.f32 %v369, %v564
    %v579 = vlaneseq
    %v580 = vshrl.u32 %v579, 7
    %v581 = vsub.s32 6, %v580
    %v582 = vrot.slane %v65, %v581
    %v583 = vlaneseq
    %v584 = vshrl.u32 %v583, 7
    %v585 = vsub.s32 6, %v584
    %v586 = vrot.slane %v66, %v585
    %v587 = vlaneseq
    %v588 = vshrl.u32 %v587, 7
    %v589 = vsub.s32 6, %v588
    %v590 = vrot.slane %v67, %v589
    %v591 = vlaneseq
    %v592 = vshrl.u32 %v591, 7
    %v593 = vsub.s32 6, %v592
    %v594 = vrot.slane %v68, %v593
    %599 = vrot.lane.b32.xlu0 %v582, 32
    %v600 = vpop.permute.xlu0 %599
    %601 = vrot.lane.b32.xlu0 %v586, 32
    %v602 = vpop.permute.xlu0 %601
    %603 = vrot.lane.b32.xlu0 %v590, 32
    %v604 = vpop.permute.xlu0 %603
    %605 = vrot.lane.b32.xlu0 %v594, 32
    %v606 = vpop.permute.xlu0 %605
    %vm607 = vcmask 261120
    %v608 = vsel %vm607, %v600, %v602
    %v609 = vsel %vm607, %v602, %v604
    %v610 = vsel %vm607, %v604, %v606
    %v616 = vmul.f32 %v345, %v600
    %v617 = vmul.f32 %v346, %v608
    %v618 = vmul.f32 %v347, %v609
    %v619 = vmul.f32 %v348, %v610
    %v620 = vmul.f32 %v369, %v606
    %v621 = vlaneseq
    %v622 = vshrl.u32 %v621, 7
    %v623 = vsub.s32 7, %v622
    %v624 = vrot.slane %v65, %v623
    %v625 = vlaneseq
    %v626 = vshrl.u32 %v625, 7
    %v627 = vsub.s32 7, %v626
    %v628 = vrot.slane %v66, %v627
    %v629 = vlaneseq
    %v630 = vshrl.u32 %v629, 7
    %v631 = vsub.s32 7, %v630
    %v632 = vrot.slane %v67, %v631
    %v633 = vlaneseq
    %v634 = vshrl.u32 %v633, 7
    %v635 = vsub.s32 7, %v634
    %v636 = vrot.slane %v68, %v635
    %641 = vrot.lane.b32.xlu0 %v624, 33
    %v642 = vpop.permute.xlu0 %641
    %643 = vrot.lane.b32.xlu0 %v628, 33
    %v644 = vpop.permute.xlu0 %643
    %645 = vrot.lane.b32.xlu0 %v632, 33
    %v646 = vpop.permute.xlu0 %645
    %647 = vrot.lane.b32.xlu0 %v636, 33
    %v648 = vpop.permute.xlu0 %647
    %vm649 = vcmask 269312
    %v650 = vsel %vm649, %v642, %v644
    %v651 = vsel %vm649, %v644, %v646
    %v652 = vsel %vm649, %v646, %v648
    %v658 = vmul.f32 %v345, %v642
    %v659 = vmul.f32 %v346, %v650
    %v660 = vmul.f32 %v347, %v651
    %v661 = vmul.f32 %v348, %v652
    %v662 = vmul.f32 %v369, %v648
    %v663 = vlaneseq
    %v664 = vshrl.u32 %v663, 7
    %v665 = vsub.s32 0, %v664
    %v666 = vrot.slane %v69, %v665
    %v667 = vlaneseq
    %v668 = vshrl.u32 %v667, 7
    %v669 = vsub.s32 0, %v668
    %v670 = vrot.slane %v70, %v669
    %v671 = vlaneseq
    %v672 = vshrl.u32 %v671, 7
    %v673 = vsub.s32 0, %v672
    %v674 = vrot.slane %v71, %v673
    %v675 = vlaneseq
    %v676 = vshrl.u32 %v675, 7
    %v677 = vsub.s32 0, %v676
    %v678 = vrot.slane %v72, %v677
    %683 = vrot.lane.b32.xlu0 %v666, 34
    %v684 = vpop.permute.xlu0 %683
    %685 = vrot.lane.b32.xlu0 %v670, 34
    %v686 = vpop.permute.xlu0 %685
    %687 = vrot.lane.b32.xlu0 %v674, 34
    %v688 = vpop.permute.xlu0 %687
    %689 = vrot.lane.b32.xlu0 %v678, 34
    %v690 = vpop.permute.xlu0 %689
    %vm691 = vcmask 277504
    %v692 = vsel %vm691, %v684, %v686
    %v693 = vsel %vm691, %v686, %v688
    %v694 = vsel %vm691, %v688, %v690
    %v700 = vmul.f32 %v345, %v684
    %v701 = vmul.f32 %v346, %v692
    %v702 = vmul.f32 %v347, %v693
    %v703 = vmul.f32 %v348, %v694
    %v704 = vmul.f32 %v369, %v690
    %710 = vrot.lane.b32.xlu0 %v407, 127
    %v711 = vpop.permute.xlu0 %710
    %712 = vrot.lane.b32.xlu0 %v408, 127
    %v713 = vpop.permute.xlu0 %712
    %714 = vrot.lane.b32.xlu0 %v409, 127
    %v715 = vpop.permute.xlu0 %714
    %716 = vrot.lane.b32.xlu0 %v410, 127
    %v717 = vpop.permute.xlu0 %716
    %718 = vrot.lane.b32.xlu0 %v411, 127
    %v719 = vpop.permute.xlu0 %718
    %vm720 = vcmask 1039360
    %v721 = vsel %vm720, %v711, %v713
    %v722 = vsel %vm720, %v713, %v715
    %v723 = vsel %vm720, %v715, %v717
    %v724 = vsel %vm720, %v717, %v719
    %734 = vrot.lane.b32.xlu0 %v449, 126
    %v735 = vpop.permute.xlu0 %734
    %736 = vrot.lane.b32.xlu0 %v450, 126
    %v737 = vpop.permute.xlu0 %736
    %738 = vrot.lane.b32.xlu0 %v451, 126
    %v739 = vpop.permute.xlu0 %738
    %740 = vrot.lane.b32.xlu0 %v452, 126
    %v741 = vpop.permute.xlu0 %740
    %742 = vrot.lane.b32.xlu0 %v453, 126
    %v743 = vpop.permute.xlu0 %742
    %vm744 = vcmask 1031168
    %v745 = vsel %vm744, %v735, %v737
    %v746 = vsel %vm744, %v737, %v739
    %v747 = vsel %vm744, %v739, %v741
    %v748 = vsel %vm744, %v741, %v743
    %758 = vrot.lane.b32.xlu0 %v491, 112
    %v759 = vpop.permute.xlu0 %758
    %760 = vrot.lane.b32.xlu0 %v492, 112
    %v761 = vpop.permute.xlu0 %760
    %762 = vrot.lane.b32.xlu0 %v493, 112
    %v763 = vpop.permute.xlu0 %762
    %764 = vrot.lane.b32.xlu0 %v494, 112
    %v765 = vpop.permute.xlu0 %764
    %766 = vrot.lane.b32.xlu0 %v495, 112
    %v767 = vpop.permute.xlu0 %766
    %vm768 = vcmask 916480
    %v769 = vsel %vm768, %v759, %v761
    %v770 = vsel %vm768, %v761, %v763
    %v771 = vsel %vm768, %v763, %v765
    %v772 = vsel %vm768, %v765, %v767
    %782 = vrot.lane.b32.xlu0 %v532, 111
    %v783 = vpop.permute.xlu0 %782
    %784 = vrot.lane.b32.xlu0 %v533, 111
    %v785 = vpop.permute.xlu0 %784
    %786 = vrot.lane.b32.xlu0 %v534, 111
    %v787 = vpop.permute.xlu0 %786
    %788 = vrot.lane.b32.xlu0 %v535, 111
    %v789 = vpop.permute.xlu0 %788
    %790 = vrot.lane.b32.xlu0 %v536, 111
    %v791 = vpop.permute.xlu0 %790
    %vm792 = vcmask 908288
    %v793 = vsel %vm792, %v783, %v785
    %v794 = vsel %vm792, %v785, %v787
    %v795 = vsel %vm792, %v787, %v789
    %v796 = vsel %vm792, %v789, %v791
    %806 = vrot.lane.b32.xlu0 %v574, 110
    %v807 = vpop.permute.xlu0 %806
    %808 = vrot.lane.b32.xlu0 %v575, 110
    %v809 = vpop.permute.xlu0 %808
    %810 = vrot.lane.b32.xlu0 %v576, 110
    %v811 = vpop.permute.xlu0 %810
    %812 = vrot.lane.b32.xlu0 %v577, 110
    %v813 = vpop.permute.xlu0 %812
    %814 = vrot.lane.b32.xlu0 %v578, 110
    %v815 = vpop.permute.xlu0 %814
    %vm816 = vcmask 900096
    %v817 = vsel %vm816, %v807, %v809
    %v818 = vsel %vm816, %v809, %v811
    %v819 = vsel %vm816, %v811, %v813
    %v820 = vsel %vm816, %v813, %v815
    %830 = vrot.lane.b32.xlu0 %v616, 96
    %v831 = vpop.permute.xlu0 %830
    %832 = vrot.lane.b32.xlu0 %v617, 96
    %v833 = vpop.permute.xlu0 %832
    %834 = vrot.lane.b32.xlu0 %v618, 96
    %v835 = vpop.permute.xlu0 %834
    %836 = vrot.lane.b32.xlu0 %v619, 96
    %v837 = vpop.permute.xlu0 %836
    %838 = vrot.lane.b32.xlu0 %v620, 96
    %v839 = vpop.permute.xlu0 %838
    %vm840 = vcmask 785408
    %v841 = vsel %vm840, %v831, %v833
    %v842 = vsel %vm840, %v833, %v835
    %v843 = vsel %vm840, %v835, %v837
    %v844 = vsel %vm840, %v837, %v839
    %854 = vrot.lane.b32.xlu0 %v658, 95
    %v855 = vpop.permute.xlu0 %854
    %856 = vrot.lane.b32.xlu0 %v659, 95
    %v857 = vpop.permute.xlu0 %856
    %858 = vrot.lane.b32.xlu0 %v660, 95
    %v859 = vpop.permute.xlu0 %858
    %860 = vrot.lane.b32.xlu0 %v661, 95
    %v861 = vpop.permute.xlu0 %860
    %862 = vrot.lane.b32.xlu0 %v662, 95
    %v863 = vpop.permute.xlu0 %862
    %vm864 = vcmask 777216
    %v865 = vsel %vm864, %v855, %v857
    %v866 = vsel %vm864, %v857, %v859
    %v867 = vsel %vm864, %v859, %v861
    %v868 = vsel %vm864, %v861, %v863
    %878 = vrot.lane.b32.xlu0 %v700, 94
    %v879 = vpop.permute.xlu0 %878
    %880 = vrot.lane.b32.xlu0 %v701, 94
    %v881 = vpop.permute.xlu0 %880
    %882 = vrot.lane.b32.xlu0 %v702, 94
    %v883 = vpop.permute.xlu0 %882
    %884 = vrot.lane.b32.xlu0 %v703, 94
    %v885 = vpop.permute.xlu0 %884
    %886 = vrot.lane.b32.xlu0 %v704, 94
    %v887 = vpop.permute.xlu0 %886
    %vm888 = vcmask 769024
    %v889 = vsel %vm888, %v879, %v881
    %v890 = vsel %vm888, %v881, %v883
    %v891 = vsel %vm888, %v883, %v885
    %v892 = vsel %vm888, %v885, %v887
    %v897 = vpack.c.bf16 %v721, %v365
    %v898 = vpack.c.bf16 %v722, %v366
    %v899 = vpack.c.bf16 %v723, %v367
    %v900 = vpack.c.bf16 %v724, %v368
    %v901 = vpack.c.bf16 %v769, %v745
    %v902 = vpack.c.bf16 %v770, %v746
    %v903 = vpack.c.bf16 %v771, %v747
    %v904 = vpack.c.bf16 %v772, %v748
    %v905 = vpack.c.bf16 %v817, %v793
    %v906 = vpack.c.bf16 %v818, %v794
    %v907 = vpack.c.bf16 %v819, %v795
    %v908 = vpack.c.bf16 %v820, %v796
    %v909 = vpack.c.bf16 %v865, %v841
    %v910 = vpack.c.bf16 %v866, %v842
    %v911 = vpack.c.bf16 %v867, %v843
    %v912 = vpack.c.bf16 %v868, %v844
    %v913 = vpack.c.bf16 %v889, %v889
    %v914 = vpack.c.bf16 %v890, %v890
    %v915 = vpack.c.bf16 %v891, %v891
    %v916 = vpack.c.bf16 %v892, %v892
    %vm917 = vcmask 588800
    %v919 = vsel %vm917, %v344, 0
    %vm921 = vcmask 1043456
    %v923 = vsel %vm921, %v913, 0
    %v926 = vsel %vm921, %v914, 0
    %v929 = vsel %vm921, %v915, 0
    %v932 = vsel %vm921, %v916, 0
    %934 = vmatprep.subr.bf16.mxu0 %v898
    %935 = vmatpush1.bf16.msra.mxu0 %v897
    %936 = vmatprep.subr.bf16.mxu0 %v902
    %937 = vmatpush1.bf16.msra.mxu0 %v901
    %938 = vmatprep.subr.bf16.mxu0 %v906
    %939 = vmatpush1.bf16.msra.mxu0 %v905
    %940 = vmatprep.subr.bf16.mxu0 %v910
    %941 = vmatpush1.bf16.msra.mxu0 %v909
    %942 = vmatprep.subr.bf16.mxu0 %v926
    %943 = vmatpush1.bf16.msra.mxu0 %v923
    %944 = vmatprep.subr.bf16.mxu0 0
    %945 = vmatpush1.bf16.msra.mxu0 0
    %946 = vmatprep.subr.bf16.mxu0 0
    %947 = vmatpush1.bf16.msra.mxu0 0
    %948 = vmatprep.subr.bf16.mxu0 0
    %949 = vmatpush1.bf16.msra.mxu0 0
    %950 = vmatprep.subr.bf16.mxu0 0
    %951 = vmatpush1.bf16.msra.mxu0 0
    %952 = vmatprep.subr.bf16.mxu0 0
    %953 = vmatpush1.bf16.msra.mxu0 0
    %954 = vmatprep.subr.bf16.mxu0 0
    %955 = vmatpush1.bf16.msra.mxu0 0
    %956 = vmatprep.subr.bf16.mxu0 0
    %957 = vmatpush1.bf16.msra.mxu0 0
    %958 = vmatprep.subr.bf16.mxu0 0
    %959 = vmatpush1.bf16.msra.mxu0 0
    %960 = vmatprep.subr.bf16.mxu0 0
    %961 = vmatpush1.bf16.msra.mxu0 0
    %962 = vmatprep.subr.bf16.mxu0 0
    %963 = vmatpush1.bf16.msra.mxu0 0
    %964 = vmatprep.subr.bf16.mxu0 0
    %965 = vmatpush1.bf16.msra.mxu0 0
    %966 = vmatprep.mubr.bf16.mxu0 0
    %967 = vmatmul.mubr.bf16.gmra.mrb[0].mxu0 %v919
    %v968 = vpop.f32.mrb[0].mxu0
    %v969 = vadd.f32 0.0, %v968
    %v970 = vpop.f32.mrb[0].mxu0
    %v971 = vadd.f32 0.0, %v970
    %v972 = vpop.f32.mrb[0].mxu0
    %v973 = vpop.f32.mrb[0].mxu0
    %974 = vdwg.mxu0
    %975 = vmatprep.subr.bf16.mxu0 %v900
    %976 = vmatpush1.bf16.msra.mxu0 %v899
    %977 = vmatprep.subr.bf16.mxu0 %v904
    %978 = vmatpush1.bf16.msra.mxu0 %v903
    %979 = vmatprep.subr.bf16.mxu0 %v908
    %980 = vmatpush1.bf16.msra.mxu0 %v907
    %981 = vmatprep.subr.bf16.mxu0 %v912
    %982 = vmatpush1.bf16.msra.mxu0 %v911
    %983 = vmatprep.subr.bf16.mxu0 %v932
    %984 = vmatpush1.bf16.msra.mxu0 %v929
    %985 = vmatprep.subr.bf16.mxu0 0
    %986 = vmatpush1.bf16.msra.mxu0 0
    %987 = vmatprep.subr.bf16.mxu0 0
    %988 = vmatpush1.bf16.msra.mxu0 0
    %989 = vmatprep.subr.bf16.mxu0 0
    %990 = vmatpush1.bf16.msra.mxu0 0
    %991 = vmatprep.subr.bf16.mxu0 0
    %992 = vmatpush1.bf16.msra.mxu0 0
    %993 = vmatprep.subr.bf16.mxu0 0
    %994 = vmatpush1.bf16.msra.mxu0 0
    %995 = vmatprep.subr.bf16.mxu0 0
    %996 = vmatpush1.bf16.msra.mxu0 0
    %997 = vmatprep.subr.bf16.mxu0 0
    %998 = vmatpush1.bf16.msra.mxu0 0
    %999 = vmatprep.subr.bf16.mxu0 0
    %1000 = vmatpush1.bf16.msra.mxu0 0
    %1001 = vmatprep.subr.bf16.mxu0 0
    %1002 = vmatpush1.bf16.msra.mxu0 0
    %1003 = vmatprep.subr.bf16.mxu0 0
    %1004 = vmatpush1.bf16.msra.mxu0 0
    %1005 = vmatprep.subr.bf16.mxu0 0
    %1006 = vmatpush1.bf16.msra.mxu0 0
    %1007 = vmatprep.mubr.bf16.mxu0 0
    %1008 = vmatmul.mubr.bf16.gmra.mrb[0].mxu0 %v919
    %v1009 = vpop.f32.mrb[0].mxu0
    %v1010 = vadd.f32 0.0, %v1009
    %v1011 = vpop.f32.mrb[0].mxu0
    %v1012 = vadd.f32 0.0, %v1011
    %v1013 = vpop.f32.mrb[0].mxu0
    %v1014 = vpop.f32.mrb[0].mxu0
    %1015 = vdwg.mxu0
    %v1016 = vld [vmem:[%s4] sm:$0xf]
    %v1017 = vld [vmem:[%s5] sm:$0xf]
    %v1018 = vsel %vm921, %v969, 0.0
    %v1019 = vsel %vm921, %v971, 0.0
    %v1020 = vadd.f32 %v1018, %v1019
    %v1021 = vsel %vm921, %v1010, 0.0
    %v1022 = vadd.f32 %v1020, %v1021
    %v1023 = vsel %vm921, %v1012, 0.0
    %v1024 = vadd.f32 %v1022, %v1023
    %1025 = vadd.xlane.f32.xlu0 %v1024
    %v1026 = vpop.xlane.xlu0 %1025
    %v1027 = vmul.f32 %v1026, 0.001953125
    %v1028 = vsub.f32 %v969, %v1027
    %v1029 = vsub.f32 %v971, %v1027
    %v1030 = vsub.f32 %v1010, %v1027
    %v1031 = vsub.f32 %v1012, %v1027
    %v1032 = vmul.f32 %v1028, %v1028
    %v1033 = vmul.f32 %v1029, %v1029
    %v1034 = vmul.f32 %v1030, %v1030
    %v1035 = vmul.f32 %v1031, %v1031
    %v1036 = vsel %vm921, %v1032, 0.0
    %v1037 = vsel %vm921, %v1033, 0.0
    %v1038 = vadd.f32 %v1036, %v1037
    %v1039 = vsel %vm921, %v1034, 0.0
    %v1040 = vadd.f32 %v1038, %v1039
    %v1041 = vsel %vm921, %v1035, 0.0
    %v1042 = vadd.f32 %v1040, %v1041
    %1043 = vadd.xlane.f32.xlu0 %v1042
    %v1044 = vpop.xlane.xlu0 %1043
    %v1045 = vmul.f32 %v1044, 0.001953125
    %v1046 = vadd.f32 %v1045, 1e-05
    %v1047 = vrsqrt.pop %v1046
    %v1048 = vmul.f32 %v1028, %v1047
    %v1049 = vmul.f32 %v1029, %v1047
    %v1050 = vmul.f32 %v1030, %v1047
    %v1051 = vmul.f32 %v1031, %v1047
    %1053 = vset.pattern.permute.xlu0 0
    %1054 = vperm.xlu0 %1053, %v1016
    %v1055 = vpop.permute.xlu0 %1054
    %v1057 = vmul.f32 %v1048, %v1055
    %v1058 = vmul.f32 %v1049, %v1055
    %v1059 = vmul.f32 %v1050, %v1055
    %v1060 = vmul.f32 %v1051, %v1055
    %1062 = vset.pattern.permute.xlu0 0
    %1063 = vperm.xlu0 %1062, %v1017
    %v1064 = vpop.permute.xlu0 %1063
    %v1066 = vadd.f32 %v1057, %v1064
    %v1067 = vadd.f32 %v1058, %v1064
    %v1068 = vadd.f32 %v1059, %v1064
    %v1069 = vadd.f32 %v1060, %v1064
    %v1070 = vmax.f32 %v1066, 0.0
    %v1071 = vmax.f32 %v1067, 0.0
    %v1072 = vmax.f32 %v1068, 0.0
    %v1073 = vmax.f32 %v1069, 0.0
    %1078 = vrot.lane.b32.xlu0 %v1070, 17
    %v1079 = vpop.permute.xlu0 %1078
    %1080 = vrot.lane.b32.xlu0 %v1071, 17
    %v1081 = vpop.permute.xlu0 %1080
    %1082 = vrot.lane.b32.xlu0 %v1072, 17
    %v1083 = vpop.permute.xlu0 %1082
    %1084 = vrot.lane.b32.xlu0 %v1073, 17
    %v1085 = vpop.permute.xlu0 %1084
    %v1086 = vsel %vm73, %v1079, %v1081
    %v1087 = vsel %vm73, %v1081, %v1083
    %v1088 = vsel %vm73, %v1083, %v1085
    %1094 = vst.msk [vmem:[#allocation2] sm:$0xf] %vm306, %v1079
    %1095 = vst [vmem:[#allocation2 + $0x8] sm:$0xf] %v1086
    %1096 = vst [vmem:[#allocation2 + $0x10] sm:$0xf] %v1087
    %1097 = vst [vmem:[#allocation2 + $0x18] sm:$0xf] %v1088
    %1098 = vst.msk [vmem:[#allocation2 + $0x20] sm:$0xf] %vm311, %v1085
    %1099 = vst.msk [vmem:[#allocation2] sm:$0xf0] %vm337, 0.0
    %1100 = vst [vmem:[#allocation2 + $0x8] sm:$0xf0] 0.0
    %1101 = vst [vmem:[#allocation2 + $0x10] sm:$0xf0] 0.0
    %1102 = vst [vmem:[#allocation2 + $0x18] sm:$0xf0] 0.0
    %1103 = vst.msk [vmem:[#allocation2 + $0x20] sm:$0xf0] %vm342, 0.0
    %v1104 = vld [vmem:[%s6] sm:$0x3]
    %v1105 = vld [vmem:[#allocation2] sm:$0xff]
    %v1106 = vld [vmem:[#allocation2 + $0x8] sm:$0xff]
    %v1107 = vld [vmem:[#allocation2 + $0x10] sm:$0xff]
    %v1108 = vld [vmem:[#allocation2 + $0x18] sm:$0xff]
    %v1109 = vmul.f32 %v1105, %v352
    %v1110 = vmul.f32 %v1106, %v356
    %v1111 = vmul.f32 %v1107, %v360
    %v1112 = vmul.f32 %v1108, %v364
    %v1113 = vld [vmem:[#allocation2 + $0x20] sm:$0xff]
    %v1114 = vmul.f32 %v1105, %v391
    %v1115 = vmul.f32 %v1106, %v399
    %v1116 = vmul.f32 %v1107, %v400
    %v1117 = vmul.f32 %v1108, %v401
    %v1118 = vmul.f32 %v1113, %v397
    %v1119 = vmul.f32 %v1105, %v433
    %v1120 = vmul.f32 %v1106, %v441
    %v1121 = vmul.f32 %v1107, %v442
    %v1122 = vmul.f32 %v1108, %v443
    %v1123 = vmul.f32 %v1113, %v439
    %v1124 = vmul.f32 %v1105, %v475
    %v1125 = vmul.f32 %v1106, %v483
    %v1126 = vmul.f32 %v1107, %v484
    %v1127 = vmul.f32 %v1108, %v485
    %v1128 = vmul.f32 %v1113, %v481
    %v1129 = vmul.f32 %v1105, %v517
    %v1130 = vmul.f32 %v1106, %v524
    %v1131 = vmul.f32 %v1107, %v525
    %v1132 = vmul.f32 %v1108, %v526
    %v1133 = vmul.f32 %v1113, %v523
    %v1134 = vmul.f32 %v1105, %v558
    %v1135 = vmul.f32 %v1106, %v566
    %v1136 = vmul.f32 %v1107, %v567
    %v1137 = vmul.f32 %v1108, %v568
    %v1138 = vmul.f32 %v1113, %v564
    %v1139 = vmul.f32 %v1105, %v600
    %v1140 = vmul.f32 %v1106, %v608
    %v1141 = vmul.f32 %v1107, %v609
    %v1142 = vmul.f32 %v1108, %v610
    %v1143 = vmul.f32 %v1113, %v606
    %v1144 = vmul.f32 %v1105, %v642
    %v1145 = vmul.f32 %v1106, %v650
    %v1146 = vmul.f32 %v1107, %v651
    %v1147 = vmul.f32 %v1108, %v652
    %v1148 = vmul.f32 %v1113, %v648
    %v1149 = vmul.f32 %v1105, %v684
    %v1150 = vmul.f32 %v1106, %v692
    %v1151 = vmul.f32 %v1107, %v693
    %v1152 = vmul.f32 %v1108, %v694
    %v1153 = vmul.f32 %v1113, %v690
    %1159 = vrot.lane.b32.xlu0 %v1114, 127
    %v1160 = vpop.permute.xlu0 %1159
    %1161 = vrot.lane.b32.xlu0 %v1115, 127
    %v1162 = vpop.permute.xlu0 %1161
    %1163 = vrot.lane.b32.xlu0 %v1116, 127
    %v1164 = vpop.permute.xlu0 %1163
    %1165 = vrot.lane.b32.xlu0 %v1117, 127
    %v1166 = vpop.permute.xlu0 %1165
    %1167 = vrot.lane.b32.xlu0 %v1118, 127
    %v1168 = vpop.permute.xlu0 %1167
    %v1169 = vsel %vm720, %v1160, %v1162
    %v1170 = vsel %vm720, %v1162, %v1164
    %v1171 = vsel %vm720, %v1164, %v1166
    %v1172 = vsel %vm720, %v1166, %v1168
    %1182 = vrot.lane.b32.xlu0 %v1119, 126
    %v1183 = vpop.permute.xlu0 %1182
    %1184 = vrot.lane.b32.xlu0 %v1120, 126
    %v1185 = vpop.permute.xlu0 %1184
    %1186 = vrot.lane.b32.xlu0 %v1121, 126
    %v1187 = vpop.permute.xlu0 %1186
    %1188 = vrot.lane.b32.xlu0 %v1122, 126
    %v1189 = vpop.permute.xlu0 %1188
    %1190 = vrot.lane.b32.xlu0 %v1123, 126
    %v1191 = vpop.permute.xlu0 %1190
    %v1192 = vsel %vm744, %v1183, %v1185
    %v1193 = vsel %vm744, %v1185, %v1187
    %v1194 = vsel %vm744, %v1187, %v1189
    %v1195 = vsel %vm744, %v1189, %v1191
    %1205 = vrot.lane.b32.xlu0 %v1124, 112
    %v1206 = vpop.permute.xlu0 %1205
    %1207 = vrot.lane.b32.xlu0 %v1125, 112
    %v1208 = vpop.permute.xlu0 %1207
    %1209 = vrot.lane.b32.xlu0 %v1126, 112
    %v1210 = vpop.permute.xlu0 %1209
    %1211 = vrot.lane.b32.xlu0 %v1127, 112
    %v1212 = vpop.permute.xlu0 %1211
    %1213 = vrot.lane.b32.xlu0 %v1128, 112
    %v1214 = vpop.permute.xlu0 %1213
    %v1215 = vsel %vm768, %v1206, %v1208
    %v1216 = vsel %vm768, %v1208, %v1210
    %v1217 = vsel %vm768, %v1210, %v1212
    %v1218 = vsel %vm768, %v1212, %v1214
    %1228 = vrot.lane.b32.xlu0 %v1129, 111
    %v1229 = vpop.permute.xlu0 %1228
    %1230 = vrot.lane.b32.xlu0 %v1130, 111
    %v1231 = vpop.permute.xlu0 %1230
    %1232 = vrot.lane.b32.xlu0 %v1131, 111
    %v1233 = vpop.permute.xlu0 %1232
    %1234 = vrot.lane.b32.xlu0 %v1132, 111
    %v1235 = vpop.permute.xlu0 %1234
    %1236 = vrot.lane.b32.xlu0 %v1133, 111
    %v1237 = vpop.permute.xlu0 %1236
    %v1238 = vsel %vm792, %v1229, %v1231
    %v1239 = vsel %vm792, %v1231, %v1233
    %v1240 = vsel %vm792, %v1233, %v1235
    %v1241 = vsel %vm792, %v1235, %v1237
    %1251 = vrot.lane.b32.xlu0 %v1134, 110
    %v1252 = vpop.permute.xlu0 %1251
    %1253 = vrot.lane.b32.xlu0 %v1135, 110
    %v1254 = vpop.permute.xlu0 %1253
    %1255 = vrot.lane.b32.xlu0 %v1136, 110
    %v1256 = vpop.permute.xlu0 %1255
    %1257 = vrot.lane.b32.xlu0 %v1137, 110
    %v1258 = vpop.permute.xlu0 %1257
    %1259 = vrot.lane.b32.xlu0 %v1138, 110
    %v1260 = vpop.permute.xlu0 %1259
    %v1261 = vsel %vm816, %v1252, %v1254
    %v1262 = vsel %vm816, %v1254, %v1256
    %v1263 = vsel %vm816, %v1256, %v1258
    %v1264 = vsel %vm816, %v1258, %v1260
    %1274 = vrot.lane.b32.xlu0 %v1139, 96
    %v1275 = vpop.permute.xlu0 %1274
    %1276 = vrot.lane.b32.xlu0 %v1140, 96
    %v1277 = vpop.permute.xlu0 %1276
    %1278 = vrot.lane.b32.xlu0 %v1141, 96
    %v1279 = vpop.permute.xlu0 %1278
    %1280 = vrot.lane.b32.xlu0 %v1142, 96
    %v1281 = vpop.permute.xlu0 %1280
    %1282 = vrot.lane.b32.xlu0 %v1143, 96
    %v1283 = vpop.permute.xlu0 %1282
    %v1284 = vsel %vm840, %v1275, %v1277
    %v1285 = vsel %vm840, %v1277, %v1279
    %v1286 = vsel %vm840, %v1279, %v1281
    %v1287 = vsel %vm840, %v1281, %v1283
    %1297 = vrot.lane.b32.xlu0 %v1144, 95
    %v1298 = vpop.permute.xlu0 %1297
    %1299 = vrot.lane.b32.xlu0 %v1145, 95
    %v1300 = vpop.permute.xlu0 %1299
    %1301 = vrot.lane.b32.xlu0 %v1146, 95
    %v1302 = vpop.permute.xlu0 %1301
    %1303 = vrot.lane.b32.xlu0 %v1147, 95
    %v1304 = vpop.permute.xlu0 %1303
    %1305 = vrot.lane.b32.xlu0 %v1148, 95
    %v1306 = vpop.permute.xlu0 %1305
    %v1307 = vsel %vm864, %v1298, %v1300
    %v1308 = vsel %vm864, %v1300, %v1302
    %v1309 = vsel %vm864, %v1302, %v1304
    %v1310 = vsel %vm864, %v1304, %v1306
    %1320 = vrot.lane.b32.xlu0 %v1149, 94
    %v1321 = vpop.permute.xlu0 %1320
    %1322 = vrot.lane.b32.xlu0 %v1150, 94
    %v1323 = vpop.permute.xlu0 %1322
    %1324 = vrot.lane.b32.xlu0 %v1151, 94
    %v1325 = vpop.permute.xlu0 %1324
    %1326 = vrot.lane.b32.xlu0 %v1152, 94
    %v1327 = vpop.permute.xlu0 %1326
    %1328 = vrot.lane.b32.xlu0 %v1153, 94
    %v1329 = vpop.permute.xlu0 %1328
    %v1330 = vsel %vm888, %v1321, %v1323
    %v1331 = vsel %vm888, %v1323, %v1325
    %v1332 = vsel %vm888, %v1325, %v1327
    %v1333 = vsel %vm888, %v1327, %v1329
    %v1338 = vpack.c.bf16 %v1169, %v1109
    %v1339 = vpack.c.bf16 %v1170, %v1110
    %v1340 = vpack.c.bf16 %v1171, %v1111
    %v1341 = vpack.c.bf16 %v1172, %v1112
    %v1342 = vpack.c.bf16 %v1215, %v1192
    %v1343 = vpack.c.bf16 %v1216, %v1193
    %v1344 = vpack.c.bf16 %v1217, %v1194
    %v1345 = vpack.c.bf16 %v1218, %v1195
    %v1346 = vpack.c.bf16 %v1261, %v1238
    %v1347 = vpack.c.bf16 %v1262, %v1239
    %v1348 = vpack.c.bf16 %v1263, %v1240
    %v1349 = vpack.c.bf16 %v1264, %v1241
    %v1350 = vpack.c.bf16 %v1307, %v1284
    %v1351 = vpack.c.bf16 %v1308, %v1285
    %v1352 = vpack.c.bf16 %v1309, %v1286
    %v1353 = vpack.c.bf16 %v1310, %v1287
    %v1354 = vpack.c.bf16 %v1330, %v1330
    %v1355 = vpack.c.bf16 %v1331, %v1331
    %v1356 = vpack.c.bf16 %v1332, %v1332
    %v1357 = vpack.c.bf16 %v1333, %v1333
    %v1359 = vsel %vm917, %v1104, 0
    %v1362 = vsel %vm921, %v1354, 0
    %v1365 = vsel %vm921, %v1355, 0
    %v1368 = vsel %vm921, %v1356, 0
    %v1371 = vsel %vm921, %v1357, 0
    %1373 = vmatprep.subr.bf16.mxu0 %v1339
    %1374 = vmatpush1.bf16.msra.mxu0 %v1338
    %1375 = vmatprep.subr.bf16.mxu0 %v1343
    %1376 = vmatpush1.bf16.msra.mxu0 %v1342
    %1377 = vmatprep.subr.bf16.mxu0 %v1347
    %1378 = vmatpush1.bf16.msra.mxu0 %v1346
    %1379 = vmatprep.subr.bf16.mxu0 %v1351
    %1380 = vmatpush1.bf16.msra.mxu0 %v1350
    %1381 = vmatprep.subr.bf16.mxu0 %v1365
    %1382 = vmatpush1.bf16.msra.mxu0 %v1362
    %1383 = vmatprep.subr.bf16.mxu0 0
    %1384 = vmatpush1.bf16.msra.mxu0 0
    %1385 = vmatprep.subr.bf16.mxu0 0
    %1386 = vmatpush1.bf16.msra.mxu0 0
    %1387 = vmatprep.subr.bf16.mxu0 0
    %1388 = vmatpush1.bf16.msra.mxu0 0
    %1389 = vmatprep.subr.bf16.mxu0 0
    %1390 = vmatpush1.bf16.msra.mxu0 0
    %1391 = vmatprep.subr.bf16.mxu0 0
    %1392 = vmatpush1.bf16.msra.mxu0 0
    %1393 = vmatprep.subr.bf16.mxu0 0
    %1394 = vmatpush1.bf16.msra.mxu0 0
    %1395 = vmatprep.subr.bf16.mxu0 0
    %1396 = vmatpush1.bf16.msra.mxu0 0
    %1397 = vmatprep.subr.bf16.mxu0 0
    %1398 = vmatpush1.bf16.msra.mxu0 0
    %1399 = vmatprep.subr.bf16.mxu0 0
    %1400 = vmatpush1.bf16.msra.mxu0 0
    %1401 = vmatprep.subr.bf16.mxu0 0
    %1402 = vmatpush1.bf16.msra.mxu0 0
    %1403 = vmatprep.subr.bf16.mxu0 0
    %1404 = vmatpush1.bf16.msra.mxu0 0
    %1405 = vmatprep.mubr.bf16.mxu0 0
    %1406 = vmatmul.mubr.bf16.gmra.mrb[0].mxu0 %v1359
    %v1407 = vpop.f32.mrb[0].mxu0
    %v1408 = vadd.f32 0.0, %v1407
    %v1409 = vpop.f32.mrb[0].mxu0
    %v1410 = vadd.f32 0.0, %v1409
    %v1411 = vpop.f32.mrb[0].mxu0
    %v1412 = vpop.f32.mrb[0].mxu0
    %1413 = vdwg.mxu0
    %1414 = vmatprep.subr.bf16.mxu0 %v1341
    %1415 = vmatpush1.bf16.msra.mxu0 %v1340
    %1416 = vmatprep.subr.bf16.mxu0 %v1345
    %1417 = vmatpush1.bf16.msra.mxu0 %v1344
    %1418 = vmatprep.subr.bf16.mxu0 %v1349
    %1419 = vmatpush1.bf16.msra.mxu0 %v1348
    %1420 = vmatprep.subr.bf16.mxu0 %v1353
    %1421 = vmatpush1.bf16.msra.mxu0 %v1352
    %1422 = vmatprep.subr.bf16.mxu0 %v1371
    %1423 = vmatpush1.bf16.msra.mxu0 %v1368
    %1424 = vmatprep.subr.bf16.mxu0 0
    %1425 = vmatpush1.bf16.msra.mxu0 0
    %1426 = vmatprep.subr.bf16.mxu0 0
    %1427 = vmatpush1.bf16.msra.mxu0 0
    %1428 = vmatprep.subr.bf16.mxu0 0
    %1429 = vmatpush1.bf16.msra.mxu0 0
    %1430 = vmatprep.subr.bf16.mxu0 0
    %1431 = vmatpush1.bf16.msra.mxu0 0
    %1432 = vmatprep.subr.bf16.mxu0 0
    %1433 = vmatpush1.bf16.msra.mxu0 0
    %1434 = vmatprep.subr.bf16.mxu0 0
    %1435 = vmatpush1.bf16.msra.mxu0 0
    %1436 = vmatprep.subr.bf16.mxu0 0
    %1437 = vmatpush1.bf16.msra.mxu0 0
    %1438 = vmatprep.subr.bf16.mxu0 0
    %1439 = vmatpush1.bf16.msra.mxu0 0
    %1440 = vmatprep.subr.bf16.mxu0 0
    %1441 = vmatpush1.bf16.msra.mxu0 0
    %1442 = vmatprep.subr.bf16.mxu0 0
    %1443 = vmatpush1.bf16.msra.mxu0 0
    %1444 = vmatprep.subr.bf16.mxu0 0
    %1445 = vmatpush1.bf16.msra.mxu0 0
    %1446 = vmatprep.mubr.bf16.mxu0 0
    %1447 = vmatmul.mubr.bf16.gmra.mrb[0].mxu0 %v1359
    %v1448 = vpop.f32.mrb[0].mxu0
    %v1449 = vadd.f32 0.0, %v1448
    %v1450 = vpop.f32.mrb[0].mxu0
    %v1451 = vadd.f32 0.0, %v1450
    %v1452 = vpop.f32.mrb[0].mxu0
    %v1453 = vpop.f32.mrb[0].mxu0
    %1454 = vdwg.mxu0
    %v1455 = vld [vmem:[%s7] sm:$0xf]
    %v1456 = vld [vmem:[%s8] sm:$0xf]
    %v1457 = vsel %vm921, %v1408, 0.0
    %v1458 = vsel %vm921, %v1410, 0.0
    %v1459 = vadd.f32 %v1457, %v1458
    %v1460 = vsel %vm921, %v1449, 0.0
    %v1461 = vadd.f32 %v1459, %v1460
    %v1462 = vsel %vm921, %v1451, 0.0
    %v1463 = vadd.f32 %v1461, %v1462
    %1464 = vadd.xlane.f32.xlu0 %v1463
    %v1465 = vpop.xlane.xlu0 %1464
    %v1466 = vmul.f32 %v1465, 0.001953125
    %v1467 = vsub.f32 %v1408, %v1466
    %v1468 = vsub.f32 %v1410, %v1466
    %v1469 = vsub.f32 %v1449, %v1466
    %v1470 = vsub.f32 %v1451, %v1466
    %v1471 = vmul.f32 %v1467, %v1467
    %v1472 = vmul.f32 %v1468, %v1468
    %v1473 = vmul.f32 %v1469, %v1469
    %v1474 = vmul.f32 %v1470, %v1470
    %v1475 = vsel %vm921, %v1471, 0.0
    %v1476 = vsel %vm921, %v1472, 0.0
    %v1477 = vadd.f32 %v1475, %v1476
    %v1478 = vsel %vm921, %v1473, 0.0
    %v1479 = vadd.f32 %v1477, %v1478
    %v1480 = vsel %vm921, %v1474, 0.0
    %v1481 = vadd.f32 %v1479, %v1480
    %1482 = vadd.xlane.f32.xlu0 %v1481
    %v1483 = vpop.xlane.xlu0 %1482
    %v1484 = vmul.f32 %v1483, 0.001953125
    %v1485 = vadd.f32 %v1484, 1e-05
    %v1486 = vrsqrt.pop %v1485
    %v1487 = vmul.f32 %v1467, %v1486
    %v1488 = vmul.f32 %v1468, %v1486
    %v1489 = vmul.f32 %v1469, %v1486
    %v1490 = vmul.f32 %v1470, %v1486
    %1492 = vset.pattern.permute.xlu0 0
    %1493 = vperm.xlu0 %1492, %v1455
    %v1494 = vpop.permute.xlu0 %1493
    %v1496 = vmul.f32 %v1487, %v1494
    %v1497 = vmul.f32 %v1488, %v1494
    %v1498 = vmul.f32 %v1489, %v1494
    %v1499 = vmul.f32 %v1490, %v1494
    %1501 = vset.pattern.permute.xlu0 0
    %1502 = vperm.xlu0 %1501, %v1456
    %v1503 = vpop.permute.xlu0 %1502
    %v1505 = vadd.f32 %v1496, %v1503
    %v1506 = vadd.f32 %v1497, %v1503
    %v1507 = vadd.f32 %v1498, %v1503
    %v1508 = vadd.f32 %v1499, %v1503
    %v1509 = vmax.f32 %v1505, 0.0
    %v1510 = vmax.f32 %v1506, 0.0
    %v1511 = vmax.f32 %v1507, 0.0
    %v1512 = vmax.f32 %v1508, 0.0
    %v1517 = vcombine.low %v1509, %v1510
    %v1518 = vcombine.low %v1511, %v1512
    %1521 = vst [vmem:[#allocation8] sm:$0xff] %v1517
    %1522 = vst [vmem:[#allocation8 + $0x8] sm:$0xff] %v1518
    // Predicated region
    $region50: #{tpu_custom_call.1} parent=1 // pred_check
      _
    $region51: #{tpu_custom_call.1} parent=1 // pred_check_branch
      %1524 = sbr.rel (0) target = $region53
    $region52: #{tpu_custom_call.1} parent=1 // pred_region
      %s1526 = ssub.s32 256, 256
      %1527 = vsyncadd [#allocation5], %s1526
      %s1529 = sshll.u32 [#allocation8], 4
      %s1530 = int_to_ptr.vmem [resolvable:$true] %s1529
      %1532 = dma.vmem_to_hbm [thread:$0]  %s1530, 256, %s10, [#allocation5]
    $region53: #{tpu_custom_call.1} parent=1 // pred_fallthru
      _
    // Predicated region
    $region54: #{tpu_custom_call.1} parent=1 // pred_check
      _
    $region55: #{tpu_custom_call.1} parent=1 // pred_check_branch
      %1534 = sbr.rel (0) target = $region57
    $region56: #{tpu_custom_call.1} parent=1 // pred_region
      %1535 = dma.done [#allocation5], 256
    $region57: #{tpu_custom_call.1} parent=1 // pred_fallthru
      _
    %1536 = vsyncpa [#allocation4], 1
    %1537 = vsyncpa [#allocation7], 1
    %1538 = vsyncpa [#allocation5], 1

</llo_original>
